<compile_context>
chip_gen: v6e
topology: v6e:2x2x1
jax: 0.10.0
libtpu: 0.0.40
codegen_flags: <defaults>
</compile_context>

<pallas_src>
import jax
import jax.numpy as jnp
from jax import lax
from jax.experimental import pallas as pl
from jax.experimental.pallas import tpu as pltpu


def make_basicblock_kernel(NB, H, WC, compute_dtype):
    """Kernel closing over static shapes; processes NB images per grid step."""
    M = NB * H

    def kernel(x_ref, w1_ref, w2_ref, sb_ref, o_ref, pad_ref):
        # x_ref:   (NB, H, WC)    lane-dense activations ((W,C) folded on lanes)
        # w*_ref:  (3*WC, WC)     kh-stacked banded folded conv weights
        # sb_ref:  (4, WC)        packed BN scale/bias (s1, b1, s2, b2)
        # o_ref:   (NB, H, WC)    f32 output
        # pad_ref: (NB, H+2, WC)  row-padded VMEM scratch (compute_dtype)

        # H-direction padding=1: zero only the two 1-row halo strips per image.
        # Kept unconditional on purpose (see header): under "parallel" grid
        # semantics each core has its own scratch, so program_id==0 gating is
        # unsafe; these are two sub-(8,128) masked stores, negligible.
        zrow = jnp.zeros((NB, 1, WC), compute_dtype)
        pad_ref[:, 0:1, :] = zrow
        pad_ref[:, H + 1:H + 2, :] = zrow
        pad_ref[:, 1:H + 1, :] = x_ref[...]

        s1 = sb_ref[0:1, :]
        b1 = sb_ref[1:2, :]
        s2 = sb_ref[2:3, :]
        b2 = sb_ref[3:4, :]

        def conv(w_ref):
            # im2col over kh only: concat the three row-shifted slabs along the
            # lane (K) axis -> one (M, 3*WC) x (3*WC, WC) MXU matmul with f32
            # accumulation.  No per-kh partial sums, no zero-init accumulator.
            lhs = jnp.concatenate(
                [pad_ref[:, kh:kh + H, :] for kh in range(3)], axis=-1,
            ).reshape(M, 3 * WC)
            return jnp.dot(lhs, w_ref[...], preferred_element_type=jnp.float32)

        # conv1 + bn1 + relu  (BN / ReLU on the f32 accumulator).
        y1 = jnp.maximum(conv(w1_ref) * s1 + b1, 0.0)               # (M, WC) f32

        # conv2 + bn2: reuse the padded scratch (halo rows are still zero).
        # TODO(synk): keep y1 in vregs via pltpu.roll + boundary-row masks to
        # avoid this VMEM round-trip once M grows; store/slice kept for clarity.
        pad_ref[:, 1:H + 1, :] = y1.reshape(NB, H, WC).astype(compute_dtype)
        out = conv(w2_ref) * s2 + b2                                 # (M, WC) f32

        # Residual add (block input, in f32) + final ReLU; lane-dense store.
        o_ref[...] = jnp.maximum(
            out.reshape(NB, H, WC) + x_ref[...].astype(jnp.float32), 0.0)

    return kernel


def fold_conv3x3_weight(w_hwio, W):
    """Fold kw taps + W-direction zero padding into one banded, kh-stacked matrix.

    w_hwio: (3, 3, Cin, Cout) HWIO.  Returns A of shape (3*W*Cin, W*Cout) with
      A[kh*W*Cin + w_in*Cin + ci, w_out*Cout + co]
        = w_hwio[kh, w_in - w_out + 1, ci, co]  if |w_in - w_out| <= 1 else 0
    so conv(x)[h, :] = concat_kh(x_rowpad[h + kh, :]) @ A, where x_rowpad is the
    (H+2, W*Cin) row-padded, (W,C)-folded image.  Dropped out-of-range kw taps
    realize padding=1 in W; zero halo rows realize padding=1 in H.
    """
    Cin, Cout = w_hwio.shape[2], w_hwio.shape[3]
    # E[kw, w_in, w_out] = 1 iff w_in == w_out + kw - 1.
    E = jnp.stack([jnp.eye(W, k=1 - kw, dtype=w_hwio.dtype) for kw in range(3)])
    A = jnp.einsum('kab,hkio->haibo', E, w_hwio)        # (3, W, Cin, W, Cout)
    return A.reshape(3 * W * Cin, W * Cout)


def fold_basic_block_params(w1, w2, scale1, bias1, scale2, bias2, W,
                            compute_dtype=jnp.bfloat16):
    """One-time parameter folding; do this once per weight update, not per call."""
    a1 = fold_conv3x3_weight(w1, W).astype(compute_dtype)
    a2 = fold_conv3x3_weight(w2, W).astype(compute_dtype)
    sb = jnp.stack([jnp.tile(scale1, W), jnp.tile(bias1, W),
                    jnp.tile(scale2, W), jnp.tile(bias2, W)],
                   axis=0).astype(jnp.float32)                       # (4, W*C)
    return a1, a2, sb


def _pick_block_images(N, H, target_rows=256, min_steps=2):
    """Images per grid step: grow the MXU M-dim (NB*H) toward target_rows while
    keeping >= min_steps grid steps (pipeline priming / megacore on v7x)."""
    divisors = [d for d in range(1, N + 1) if N % d == 0]
    fit = [d for d in divisors if d * H <= target_rows] or [1]
    stepped = [d for d in fit if N // d >= min_steps]
    return max(stepped) if stepped else max(fit)


def basic_block_pallas(x_nhwc, a1, a2, sb, *, block_images=None,
                       compute_dtype=jnp.bfloat16):
    """x_nhwc: (N, H, W, C) f32.  a1/a2/sb: pre-folded params from
    fold_basic_block_params (same compute_dtype).  Returns (N, H, W, C) f32."""
    N, H, W, C = x_nhwc.shape
    WC = W * C
    NB = block_images if block_images is not None else _pick_block_images(N, H)
    assert N % NB == 0, (N, NB)

    # Lane-dense activation layout: fold (W, C) onto the lane axis (free reshape).
    x2 = x_nhwc.reshape(N, H, WC).astype(compute_dtype)

    itemsize = jnp.dtype(compute_dtype).itemsize
    # NOTE: flops counts the dense folded matmul including the zero band; this
    # is a scheduler hint only, not a roofline/efficiency number.
    cost = pl.CostEstimate(
        flops=2 * N * 2 * H * (3 * WC) * WC,
        transcendentals=0,
        bytes_accessed=(x2.size + a1.size + a2.size) * itemsize
                       + sb.size * 4 + N * H * WC * 4)

    out = pl.pallas_call(
        make_basicblock_kernel(NB, H, WC, compute_dtype),
        out_shape=jax.ShapeDtypeStruct((N, H, WC), jnp.float32),
        grid_spec=pltpu.PrefetchScalarGridSpec(
            num_scalar_prefetch=0,
            grid=(N // NB,),                                   # NB images / step
            in_specs=[
                pl.BlockSpec((NB, H, WC), lambda n: (n, 0, 0)),    # activations
                pl.BlockSpec((3 * WC, WC), lambda n: (0, 0)),      # folded conv1 w
                pl.BlockSpec((3 * WC, WC), lambda n: (0, 0)),      # folded conv2 w
                pl.BlockSpec((4, WC), lambda n: (0, 0)),           # BN scale/bias
            ],
            out_specs=pl.BlockSpec((NB, H, WC), lambda n: (n, 0, 0)),
            scratch_shapes=[pltpu.VMEM((NB, H + 2, WC), compute_dtype)],
        ),
        compiler_params=pltpu.CompilerParams(
            dimension_semantics=("parallel",),
            vmem_limit_bytes=32 * 1024 * 1024,
        ),
        cost_estimate=cost,
    )(x2, a1, a2, sb)

    return out.reshape(N, H, W, C)


def basic_block_reference(x_nhwc, w1, w2, scale1, bias1, scale2, bias2,
                          compute_dtype=jnp.float32):
    """Pure-JAX reference (lax conv, NHWC).  compute_dtype mirrors the kernel's
    matmul-input dtype; accumulation / BN / residual stay f32 either way."""
    dn = lax.conv_dimension_numbers(x_nhwc.shape, w1.shape,
                                    ('NHWC', 'HWIO', 'NHWC'))
    xc = x_nhwc.astype(compute_dtype)
    out = lax.conv_general_dilated(
        xc, w1.astype(compute_dtype), (1, 1), ((1, 1), (1, 1)),
        dimension_numbers=dn, preferred_element_type=jnp.float32)
    out = jnp.maximum(out * scale1 + bias1, 0.0)
    out = lax.conv_general_dilated(
        out.astype(compute_dtype), w2.astype(compute_dtype), (1, 1),
        ((1, 1), (1, 1)), dimension_numbers=dn,
        preferred_element_type=jnp.float32)
    out = out * scale2 + bias2
    return jnp.maximum(out + xc.astype(jnp.float32), 0.0)


if __name__ == "__main__":
    # Small demo shapes: batch=16, inplanes=planes=8, spatial 16x16 (W*C = 128).
    # Auto-picked block = 8 images/step -> M = 128 MXU rows, 2-step parallel grid.
    N, C, H, W = 16, 8, 16, 16
    eps = 1e-5

    key = jax.random.PRNGKey(0)
    kx, kw1, kw2, kg1, kb1, km1, kv1, kg2, kb2, km2, kv2 = jax.random.split(key, 11)

    x_nchw = jax.random.normal(kx, (N, C, H, W), jnp.float32)

    # Conv weights directly in HWIO layout (3, 3, Cin, Cout), no bias.
    w1 = jax.random.normal(kw1, (3, 3, C, C), jnp.float32) * 0.1
    w2 = jax.random.normal(kw2, (3, 3, C, C), jnp.float32) * 0.1

    # BatchNorm parameters (eval mode): fold into per-channel scale/bias.
    gamma1 = 1.0 + 0.1 * jax.random.normal(kg1, (C,), jnp.float32)
    beta1 = 0.1 * jax.random.normal(kb1, (C,), jnp.float32)
    rmean1 = 0.1 * jax.random.normal(km1, (C,), jnp.float32)
    rvar1 = jnp.abs(1.0 + 0.1 * jax.random.normal(kv1, (C,), jnp.float32))
    gamma2 = 1.0 + 0.1 * jax.random.normal(kg2, (C,), jnp.float32)
    beta2 = 0.1 * jax.random.normal(kb2, (C,), jnp.float32)
    rmean2 = 0.1 * jax.random.normal(km2, (C,), jnp.float32)
    rvar2 = jnp.abs(1.0 + 0.1 * jax.random.normal(kv2, (C,), jnp.float32))

    scale1 = gamma1 / jnp.sqrt(rvar1 + eps)
    bias1 = beta1 - rmean1 * scale1
    scale2 = gamma2 / jnp.sqrt(rvar2 + eps)
    bias2 = beta2 - rmean2 * scale2

    # NCHW -> NHWC once at the network boundary; all blocks stay NHWC.
    x_nhwc = jnp.transpose(x_nchw, (0, 2, 3, 1))

    # --- default path: bf16 matmul inputs, f32 accumulation / BN / residual ---
    a1, a2, sb = fold_basic_block_params(w1, w2, scale1, bias1, scale2, bias2,
                                         W, compute_dtype=jnp.bfloat16)
    out_bf16 = basic_block_pallas(x_nhwc, a1, a2, sb,
                                  compute_dtype=jnp.bfloat16)
    out_bf16 = jax.block_until_ready(out_bf16)
    ref_bf16 = basic_block_reference(x_nhwc, w1, w2, scale1, bias1, scale2,
                                     bias2, compute_dtype=jnp.bfloat16)
    ref_bf16 = jax.block_until_ready(ref_bf16)
    assert out_bf16.shape == (N, H, W, C)
    err_bf16 = float(jnp.max(jnp.abs(out_bf16 - ref_bf16)))
    assert jnp.allclose(out_bf16, ref_bf16, atol=2e-2, rtol=2e-2), err_bf16

    # --- f32 path: tight check against the f32 lax reference ---
    a1f, a2f, sbf = fold_basic_block_params(w1, w2, scale1, bias1, scale2,
                                            bias2, W, compute_dtype=jnp.float32)
    out_f32 = basic_block_pallas(x_nhwc, a1f, a2f, sbf,
                                 compute_dtype=jnp.float32)
    out_f32 = jax.block_until_ready(out_f32)
    ref_f32 = basic_block_reference(x_nhwc, w1, w2, scale1, bias1, scale2,
                                    bias2, compute_dtype=jnp.float32)
    ref_f32 = jax.block_until_ready(ref_f32)
    assert out_f32.shape == (N, H, W, C)
    err_f32 = float(jnp.max(jnp.abs(out_f32 - ref_f32)))
    assert jnp.allclose(out_f32, ref_f32, atol=1e-3, rtol=1e-3), err_f32

    print("KERNEL_OK")
</pallas_src>

<mosaic_0001>
module attributes {stable_mosaic.version = 11 : i64} {
  func.func @kernel(%arg0: i32, %arg1: memref<8x16x128xbf16, #tpu.memory_space<vmem>>, %arg2: memref<384x128xbf16, #tpu.memory_space<vmem>>, %arg3: memref<384x128xbf16, #tpu.memory_space<vmem>>, %arg4: memref<4x128xf32, #tpu.memory_space<vmem>>, %arg5: memref<8x16x128xf32, #tpu.memory_space<vmem>>, %arg6: memref<8x18x128xbf16, #tpu.memory_space<vmem>>) attributes {dimension_semantics = [#tpu.dimension_semantics<parallel>], iteration_bounds = array<i64: 2>, scalar_prefetch = 0 : i64, scratch_operands = 1 : i64, tpu.core_type = #tpu.core_type<tc>, window_params = [{transform_indices = @transform_0, window_bounds = array<i64: 8, 16, 128>}, {pipeline_mode = #tpu.pipeline_mode<synchronous>, transform_indices = @transform_1, window_bounds = array<i64: 384, 128>}, {pipeline_mode = #tpu.pipeline_mode<synchronous>, transform_indices = @transform_2, window_bounds = array<i64: 384, 128>}, {pipeline_mode = #tpu.pipeline_mode<synchronous>, transform_indices = @transform_3, window_bounds = array<i64: 4, 128>}, {transform_indices = @transform_4, window_bounds = array<i64: 8, 16, 128>}]} {
    %cst = arith.constant 0.000000e+00 : bf16
    %0 = vector.broadcast %cst : bf16 to vector<8x1x128xbf16>
    %c0 = arith.constant 0 : index
    %c0_0 = arith.constant 0 : index
    %c0_1 = arith.constant 0 : index
    %1 = vector.load %arg6[%c0, %c0_0, %c0_1] : memref<8x18x128xbf16, #tpu.memory_space<vmem>>, vector<8x1x128xbf16>
    tpu.vector_store %arg6[%c0, %c0_0, %c0_1], %0 {strides = array<i32>} : memref<8x18x128xbf16, #tpu.memory_space<vmem>>, vector<8x1x128xbf16>,
    %c0_2 = arith.constant 0 : index
    %c17 = arith.constant 17 : index
    %c0_3 = arith.constant 0 : index
    %2 = vector.load %arg6[%c0_2, %c17, %c0_3] : memref<8x18x128xbf16, #tpu.memory_space<vmem>>, vector<8x1x128xbf16>
    tpu.vector_store %arg6[%c0_2, %c17, %c0_3], %0 {strides = array<i32>} : memref<8x18x128xbf16, #tpu.memory_space<vmem>>, vector<8x1x128xbf16>,
    %c0_4 = arith.constant 0 : index
    %c0_5 = arith.constant 0 : index
    %c0_6 = arith.constant 0 : index
    %3 = vector.load %arg1[%c0_4, %c0_5, %c0_6] : memref<8x16x128xbf16, #tpu.memory_space<vmem>>, vector<8x16x128xbf16>
    %c0_7 = arith.constant 0 : index
    %c1 = arith.constant 1 : index
    %c0_8 = arith.constant 0 : index
    %4 = vector.load %arg6[%c0_7, %c1, %c0_8] : memref<8x18x128xbf16, #tpu.memory_space<vmem>>, vector<8x16x128xbf16>
    tpu.vector_store %arg6[%c0_7, %c1, %c0_8], %3 {strides = array<i32>} : memref<8x18x128xbf16, #tpu.memory_space<vmem>>, vector<8x16x128xbf16>,
    %c0_9 = arith.constant 0 : index
    %c0_10 = arith.constant 0 : index
    %5 = vector.load %arg4[%c0_9, %c0_10] : memref<4x128xf32, #tpu.memory_space<vmem>>, vector<1x128xf32>
    %c1_11 = arith.constant 1 : index
    %c0_12 = arith.constant 0 : index
    %6 = vector.load %arg4[%c1_11, %c0_12] : memref<4x128xf32, #tpu.memory_space<vmem>>, vector<1x128xf32>
    %c2 = arith.constant 2 : index
    %c0_13 = arith.constant 0 : index
    %7 = vector.load %arg4[%c2, %c0_13] : memref<4x128xf32, #tpu.memory_space<vmem>>, vector<1x128xf32>
    %c3 = arith.constant 3 : index
    %c0_14 = arith.constant 0 : index
    %8 = vector.load %arg4[%c3, %c0_14] : memref<4x128xf32, #tpu.memory_space<vmem>>, vector<1x128xf32>
    %c0_15 = arith.constant 0 : index
    %c0_16 = arith.constant 0 : index
    %c0_17 = arith.constant 0 : index
    %9 = vector.load %arg6[%c0_15, %c0_16, %c0_17] : memref<8x18x128xbf16, #tpu.memory_space<vmem>>, vector<8x16x128xbf16>
    %c0_18 = arith.constant 0 : index
    %c1_19 = arith.constant 1 : index
    %c0_20 = arith.constant 0 : index
    %10 = vector.load %arg6[%c0_18, %c1_19, %c0_20] : memref<8x18x128xbf16, #tpu.memory_space<vmem>>, vector<8x16x128xbf16>
    %c0_21 = arith.constant 0 : index
    %c2_22 = arith.constant 2 : index
    %c0_23 = arith.constant 0 : index
    %11 = vector.load %arg6[%c0_21, %c2_22, %c0_23] : memref<8x18x128xbf16, #tpu.memory_space<vmem>>, vector<8x16x128xbf16>
    %12 = tpu.concatenate %9, %10, %11 in 2 : vector<8x16x128xbf16>, vector<8x16x128xbf16>, vector<8x16x128xbf16> -> vector<8x16x384xbf16>
    %13 = vector.shape_cast %12 : vector<8x16x384xbf16> to vector<128x384xbf16>
    %c0_24 = arith.constant 0 : index
    %c0_25 = arith.constant 0 : index
    %14 = vector.load %arg2[%c0_24, %c0_25] : memref<384x128xbf16, #tpu.memory_space<vmem>>, vector<384x128xbf16>
    %cst_26 = arith.constant dense<0.000000e+00> : vector<128x128xf32>
    %15 = tpu.matmul %13, %14, %cst_26 {dimension_numbers = #tpu.dot_dimension_numbers<[1], [0], [0], [1], [0, 0, 1, 1], [], []>} : vector<128x384xbf16>, vector<384x128xbf16>, vector<128x128xf32> -> vector<128x128xf32>
    %16 = vector.broadcast %5 : vector<1x128xf32> to vector<128x128xf32>
    %17 = arith.mulf %15, %16 : vector<128x128xf32>
    %18 = vector.broadcast %6 : vector<1x128xf32> to vector<128x128xf32>
    %19 = arith.addf %17, %18 : vector<128x128xf32>
    %cst_27 = arith.constant 0.000000e+00 : f32
    %20 = vector.broadcast %cst_27 : f32 to vector<128x128xf32>
    %21 = arith.maximumf %19, %20 : vector<128x128xf32>
    %22 = vector.shape_cast %21 : vector<128x128xf32> to vector<8x16x128xf32>
    %23 = arith.truncf %22 : vector<8x16x128xf32> to vector<8x16x128xbf16>
    %c0_28 = arith.constant 0 : index
    %c1_29 = arith.constant 1 : index
    %c0_30 = arith.constant 0 : index
    %24 = vector.load %arg6[%c0_28, %c1_29, %c0_30] : memref<8x18x128xbf16, #tpu.memory_space<vmem>>, vector<8x16x128xbf16>
    tpu.vector_store %arg6[%c0_28, %c1_29, %c0_30], %23 {strides = array<i32>} : memref<8x18x128xbf16, #tpu.memory_space<vmem>>, vector<8x16x128xbf16>,
    %c0_31 = arith.constant 0 : index
    %c0_32 = arith.constant 0 : index
    %c0_33 = arith.constant 0 : index
    %25 = vector.load %arg6[%c0_31, %c0_32, %c0_33] : memref<8x18x128xbf16, #tpu.memory_space<vmem>>, vector<8x16x128xbf16>
    %c0_34 = arith.constant 0 : index
    %c1_35 = arith.constant 1 : index
    %c0_36 = arith.constant 0 : index
    %26 = vector.load %arg6[%c0_34, %c1_35, %c0_36] : memref<8x18x128xbf16, #tpu.memory_space<vmem>>, vector<8x16x128xbf16>
    %c0_37 = arith.constant 0 : index
    %c2_38 = arith.constant 2 : index
    %c0_39 = arith.constant 0 : index
    %27 = vector.load %arg6[%c0_37, %c2_38, %c0_39] : memref<8x18x128xbf16, #tpu.memory_space<vmem>>, vector<8x16x128xbf16>
    %28 = tpu.concatenate %25, %26, %27 in 2 : vector<8x16x128xbf16>, vector<8x16x128xbf16>, vector<8x16x128xbf16> -> vector<8x16x384xbf16>
    %29 = vector.shape_cast %28 : vector<8x16x384xbf16> to vector<128x384xbf16>
    %c0_40 = arith.constant 0 : index
    %c0_41 = arith.constant 0 : index
    %30 = vector.load %arg3[%c0_40, %c0_41] : memref<384x128xbf16, #tpu.memory_space<vmem>>, vector<384x128xbf16>
    %cst_42 = arith.constant dense<0.000000e+00> : vector<128x128xf32>
    %31 = tpu.matmul %29, %30, %cst_42 {dimension_numbers = #tpu.dot_dimension_numbers<[1], [0], [0], [1], [0, 0, 1, 1], [], []>} : vector<128x384xbf16>, vector<384x128xbf16>, vector<128x128xf32> -> vector<128x128xf32>
    %32 = vector.broadcast %7 : vector<1x128xf32> to vector<128x128xf32>
    %33 = arith.mulf %31, %32 : vector<128x128xf32>
    %34 = vector.broadcast %8 : vector<1x128xf32> to vector<128x128xf32>
    %35 = arith.addf %33, %34 : vector<128x128xf32>
    %36 = vector.shape_cast %35 : vector<128x128xf32> to vector<8x16x128xf32>
    %c0_43 = arith.constant 0 : index
    %c0_44 = arith.constant 0 : index
    %c0_45 = arith.constant 0 : index
    %37 = vector.load %arg1[%c0_43, %c0_44, %c0_45] : memref<8x16x128xbf16, #tpu.memory_space<vmem>>, vector<8x16x128xbf16>
    %38 = arith.extf %37 : vector<8x16x128xbf16> to vector<8x16x128xf32>
    %39 = arith.addf %36, %38 : vector<8x16x128xf32>
    %cst_46 = arith.constant 0.000000e+00 : f32
    %40 = vector.broadcast %cst_46 : f32 to vector<8x16x128xf32>
    %41 = arith.maximumf %39, %40 : vector<8x16x128xf32>
    %c0_47 = arith.constant 0 : index
    %c0_48 = arith.constant 0 : index
    %c0_49 = arith.constant 0 : index
    %42 = vector.load %arg5[%c0_47, %c0_48, %c0_49] : memref<8x16x128xf32, #tpu.memory_space<vmem>>, vector<8x16x128xf32>
    tpu.vector_store %arg5[%c0_47, %c0_48, %c0_49], %41 {strides = array<i32>} : memref<8x16x128xf32, #tpu.memory_space<vmem>>, vector<8x16x128xf32>,
    return
  }
  func.func @transform_0(%arg0: i32) -> (i32, i32, i32) {
    %c0_i32 = arith.constant 0 : i32
    %c0_i32_0 = arith.constant 0 : i32
    %c0_i32_1 = arith.constant 0 : i32
    return %arg0, %c0_i32, %c0_i32_0 : i32, i32, i32
  }
  func.func @transform_1(%arg0: i32) -> (i32, i32) {
    %c0_i32 = arith.constant 0 : i32
    %c0_i32_0 = arith.constant 0 : i32
    %c0_i32_1 = arith.constant 0 : i32
    return %c0_i32, %c0_i32_0 : i32, i32
  }
  func.func @transform_2(%arg0: i32) -> (i32, i32) {
    %c0_i32 = arith.constant 0 : i32
    %c0_i32_0 = arith.constant 0 : i32
    %c0_i32_1 = arith.constant 0 : i32
    return %c0_i32, %c0_i32_0 : i32, i32
  }
  func.func @transform_3(%arg0: i32) -> (i32, i32) {
    %c0_i32 = arith.constant 0 : i32
    %c0_i32_0 = arith.constant 0 : i32
    %c0_i32_1 = arith.constant 0 : i32
    return %c0_i32, %c0_i32_0 : i32, i32
  }
  func.func @transform_4(%arg0: i32) -> (i32, i32, i32) {
    %c0_i32 = arith.constant 0 : i32
    %c0_i32_0 = arith.constant 0 : i32
    %c0_i32_1 = arith.constant 0 : i32
    return %arg0, %c0_i32, %c0_i32_0 : i32, i32, i32
  }
}

</mosaic_0001>

<llo_original>
// kernel: tpu_custom_call.1
$region0: #{tpu_custom_call.1}
  #allocation0 [shape = 'u32[]', space=smem, size = 0x4, offset = 0x4, fixed_abs, tag = 'smem constant byte address 0x4 - core index']
  #allocation1 [shape = 'u32[144,128]{1,0:T(1,128)}', space=vmem, size = 0x12000, scoped, tag = 'internal scratch']
  #allocation2 [shape = 'bf16[8,18,128]{2,1,0:T(8,128)(2,1)}', space=vmem, size = 0xc000, scoped, tag = 'scratch operand']
  %s0 = inlined_call_operand.hbm [shape: bf16[16,16,128], index: 0, kind: input, shape index: {}]
  %s1 = inlined_call_operand.hbm [shape: bf16[384,128], index: 1, kind: input, shape index: {}]
  %s2 = inlined_call_operand.hbm [shape: bf16[384,128], index: 2, kind: input, shape index: {}]
  %s3 = inlined_call_operand.vmem [shape: f32[4,128], index: 3, kind: input, shape index: {}]
  %s4 = inlined_call_operand.hbm [shape: f32[16,16,128], index: 4, kind: output, shape index: {}]
  %s5 = sld [smem:[#allocation0]]
  $region61: #{tpu_custom_call.1} parent=0
    _
  %s7 = ssub.s32 1, %s5
  %s8 = scalar_select 0, %s7, %s5
  $region1: #{tpu_custom_call.1} parent=0
    #allocation3 [shape = 'u8[65536]{0}', space=vmem, size = 0x10000, scoped, tag = 'input window, operand 0']
    #allocation4 [shape = 's32[2]{0}', space=sflag, size = 0x8, scoped, tag = 'scoped memory for tpu_custom_call.1']
    #allocation5 [shape = 's32[2]{0}', space=sflag, size = 0x8, scoped, tag = 'scoped memory for tpu_custom_call.1']
    #allocation6 [shape = 'u8[98304]{0}', space=vmem, size = 0x18000, scoped, tag = 'input window, operand 1, single buffered']
    #allocation7 [shape = 's32[1]{0}', space=sflag, size = 0x4, scoped, tag = 'scoped memory for tpu_custom_call.1']
    #allocation8 [shape = 'u8[98304]{0}', space=vmem, size = 0x18000, scoped, tag = 'input window, operand 2, single buffered']
    #allocation9 [shape = 'u8[131072]{0}', space=vmem, size = 0x20000, scoped, tag = 'output window, operand 0']
    %9 = vsyncpa [#allocation4], 0
    %s10 = scalar_lea.sflag [#allocation4], 1
    %11 = vsyncpa %s10, 0
    %12 = vsyncpa [#allocation7], 0
    %13 = vsyncpa [#allocation5], 0
    %s14 = scalar_lea.sflag [#allocation5], 1
    %15 = vsyncpa %s14, 0
    loop: start=0, step=1, limit=4
    $region2: #{tpu_custom_call.1} parent=1 // loop_pre_header
      _
    $region3: #{tpu_custom_call.1} parent=1 // loop_header
      %s17 = sphi 0, %s21
      %p18 = scmp.ge.s32.totalorder %s17, 4
      %s27 = sphi 0, %s29
      %s30 = sphi 0, %s27
      %s31 = sphi 0, %s30
      %s47 = sphi 0, %s31
      %s51 = sphi 0, %s51
      %s53 = sphi 0, %s51
      %s54 = sphi 0, %s53
      %s68 = sphi 0, %s54
      %s72 = sphi 0, %s72
      %s74 = sphi 0, %s72
      %s75 = sphi 0, %s74
      %s89 = sphi 0, %s75
      %s93 = sphi 0, %s93
      %s95 = sphi 0, %s93
      %s96 = sphi 0, %s95
      %s110 = sphi 0, %s96
      %s116 = sphi 0, %s118
      %s119 = sphi 0, %s116
      %s120 = sphi 0, %s119
      %s136 = sphi 0, %s120
    $region4: #{tpu_custom_call.1} parent=1 // loop_header_branch
      %20 = sbr.rel (%p18) target = $region8
    $region5: #{tpu_custom_call.1} parent=1 // loop_body
      %s22 = ssub.s32 %s17, 1
      %s23 = ssub.s32 %s17, 2
      %s24 = sadd.s32 %s17, 1
      %s25 = ssub.s32 %s17, %s24
      %p26 = scmp.eq.s32.totalorder %s25, 0
      %s28 = sadd.s32 %s27, 1
      %s29 = scalar_select %p26, %s27, %s28
      %p32 = pneg %p26
      %p33 = scmp.eq.s32.totalorder %s17, 1
      %p34 = por %p32, %p33
      %p35 = scmp.ne.s32.totalorder %s27, %s30
      %p36 = scmp.eq.s32.totalorder %s17, 0
      %p37 = por %p35, %p36
      %p38 = scmp.ne.s32.totalorder %s27, %s30
      %p39 = scmp.eq.s32.totalorder %s22, 1
      %p40 = por %p38, %p39
      %p41 = scmp.ne.s32.totalorder %s30, %s31
      %p42 = scmp.eq.s32.totalorder %s22, 0
      %p43 = por %p41, %p42
      %p44 = scmp.ne.s32.totalorder %s30, %s31
      %p45 = scmp.eq.s32.totalorder %s23, 1
      %p46 = por %p44, %p45
      %p48 = scmp.ne.s32.totalorder %s31, %s47
      %p49 = scmp.eq.s32.totalorder %s23, 0
      %p50 = por %p48, %p49
      %s52 = sadd.s32 %s51, 1
      %p55 = scmp.eq.s32.totalorder %s17, 1
      %p56 = scmp.ne.s32.totalorder %s51, %s53
      %p57 = scmp.eq.s32.totalorder %s17, 0
      %p58 = por %p56, %p57
      %p59 = scmp.ne.s32.totalorder %s51, %s53
      %p60 = scmp.eq.s32.totalorder %s22, 1
      %p61 = por %p59, %p60
      %p62 = scmp.ne.s32.totalorder %s53, %s54
      %p63 = scmp.eq.s32.totalorder %s22, 0
      %p64 = por %p62, %p63
      %p65 = scmp.ne.s32.totalorder %s53, %s54
      %p66 = scmp.eq.s32.totalorder %s23, 1
      %p67 = por %p65, %p66
      %p69 = scmp.ne.s32.totalorder %s54, %s68
      %p70 = scmp.eq.s32.totalorder %s23, 0
      %p71 = por %p69, %p70
      %s73 = sadd.s32 %s72, 1
      %p76 = scmp.eq.s32.totalorder %s17, 1
      %p77 = scmp.ne.s32.totalorder %s72, %s74
      %p78 = scmp.eq.s32.totalorder %s17, 0
      %p79 = por %p77, %p78
      %p80 = scmp.ne.s32.totalorder %s72, %s74
      %p81 = scmp.eq.s32.totalorder %s22, 1
      %p82 = por %p80, %p81
      %p83 = scmp.ne.s32.totalorder %s74, %s75
      %p84 = scmp.eq.s32.totalorder %s22, 0
      %p85 = por %p83, %p84
      %p86 = scmp.ne.s32.totalorder %s74, %s75
      %p87 = scmp.eq.s32.totalorder %s23, 1
      %p88 = por %p86, %p87
      %p90 = scmp.ne.s32.totalorder %s75, %s89
      %p91 = scmp.eq.s32.totalorder %s23, 0
      %p92 = por %p90, %p91
      %s94 = sadd.s32 %s93, 1
      %p97 = scmp.eq.s32.totalorder %s17, 1
      %p98 = scmp.ne.s32.totalorder %s93, %s95
      %p99 = scmp.eq.s32.totalorder %s17, 0
      %p100 = por %p98, %p99
      %p101 = scmp.ne.s32.totalorder %s93, %s95
      %p102 = scmp.eq.s32.totalorder %s22, 1
      %p103 = por %p101, %p102
      %p104 = scmp.ne.s32.totalorder %s95, %s96
      %p105 = scmp.eq.s32.totalorder %s22, 0
      %p106 = por %p104, %p105
      %p107 = scmp.ne.s32.totalorder %s95, %s96
      %p108 = scmp.eq.s32.totalorder %s23, 1
      %p109 = por %p107, %p108
      %p111 = scmp.ne.s32.totalorder %s96, %s110
      %p112 = scmp.eq.s32.totalorder %s23, 0
      %p113 = por %p111, %p112
      %s114 = ssub.s32 %s17, %s24
      %p115 = scmp.eq.s32.totalorder %s114, 0
      %s117 = sadd.s32 %s116, 1
      %s118 = scalar_select %p115, %s116, %s117
      %p121 = pneg %p115
      %p122 = scmp.eq.s32.totalorder %s17, 1
      %p123 = por %p121, %p122
      %p124 = scmp.ne.s32.totalorder %s116, %s119
      %p125 = scmp.eq.s32.totalorder %s17, 0
      %p126 = por %p124, %p125
      %p127 = scmp.ne.s32.totalorder %s116, %s119
      %p128 = scmp.eq.s32.totalorder %s22, 1
      %p129 = por %p127, %p128
      %p130 = scmp.ne.s32.totalorder %s119, %s120
      %p131 = scmp.eq.s32.totalorder %s22, 0
      %p132 = por %p130, %p131
      %p133 = scmp.ne.s32.totalorder %s119, %s120
      %p134 = scmp.eq.s32.totalorder %s23, 1
      %p135 = por %p133, %p134
      %p137 = scmp.ne.s32.totalorder %s120, %s136
      %p138 = scmp.eq.s32.totalorder %s23, 0
      %p139 = por %p137, %p138
      %p140 = scmp.le.s32.totalorder 1, %s17
      %p141 = scmp.lt.s32.totalorder %s17, 3
      %p142 = pnand %p140, %p141
      %p143 = pneg %p142
      // Predicated region
      $region9: #{tpu_custom_call.1} parent=5 // pred_check
        _
      $region10: #{tpu_custom_call.1} parent=5 // pred_check_branch
        %145 = sbr.rel (%p142) target = $region12
      $region11: #{tpu_custom_call.1} parent=5 // pred_region
        %s146 = ssub.s32 %s17, 1
        // Predicated region
        $region13: #{tpu_custom_call.1} parent=11 // pred_check
          %p147 = pneg %p64
        $region14: #{tpu_custom_call.1} parent=11 // pred_check_branch
          %149 = sbr.rel (%p147) target = $region16
        $region15: #{tpu_custom_call.1} parent=11 // pred_region
          %s151 = ssub.s32 3072, 3072
          %152 = vsyncadd [#allocation7], %s151
          %s153 = sshll.u32 [#allocation6], 4
          %s154 = int_to_ptr.vmem [resolvable:$true] %s153
          %159 = dma.hbm_to_vmem [thread:$0]  %s1, 3072, %s154, [#allocation7], 64, 64, 4
        $region16: #{tpu_custom_call.1} parent=11 // pred_fallthru
          _
        // Predicated region
        $region17: #{tpu_custom_call.1} parent=11 // pred_check
          %p160 = pneg %p85
        $region18: #{tpu_custom_call.1} parent=11 // pred_check_branch
          %162 = sbr.rel (%p160) target = $region20
        $region19: #{tpu_custom_call.1} parent=11 // pred_region
          %s164 = ssub.s32 3072, 3072
          %165 = vsyncadd [#allocation7], %s164
          %s166 = sshll.u32 [#allocation8], 4
          %s167 = int_to_ptr.vmem [resolvable:$true] %s166
          %172 = dma.hbm_to_vmem [thread:$0]  %s2, 3072, %s167, [#allocation7], 64, 64, 4
        $region20: #{tpu_custom_call.1} parent=11 // pred_fallthru
          _
        // Predicated region
        $region21: #{tpu_custom_call.1} parent=11 // pred_check
          %p173 = pneg %p106
        $region22: #{tpu_custom_call.1} parent=11 // pred_check_branch
          %175 = sbr.rel (%p173) target = $region24
        $region23: #{tpu_custom_call.1} parent=11 // pred_region
          _
        $region24: #{tpu_custom_call.1} parent=11 // pred_fallthru
          _
      $region12: #{tpu_custom_call.1} parent=5 // pred_fallthru
        _
      %p176 = scmp.lt.s32.totalorder %s17, 2
      // Predicated region
      $region25: #{tpu_custom_call.1} parent=5 // pred_check
        %p177 = pneg %p176
      $region26: #{tpu_custom_call.1} parent=5 // pred_check_branch
        %179 = sbr.rel (%p177) target = $region28
      $region27: #{tpu_custom_call.1} parent=5 // pred_region
        // Predicated region
        $region29: #{tpu_custom_call.1} parent=27 // pred_check
          %p180 = pneg %p37
        $region30: #{tpu_custom_call.1} parent=27 // pred_check_branch
          %182 = sbr.rel (%p180) target = $region32
        $region31: #{tpu_custom_call.1} parent=27 // pred_region
          %s183 = sand.u32 %s27, 1
          %s184 = scalar_lea.sflag [#allocation4], %s183
          %s185 = sand.u32 %s27, 1
          %s186 = smul.addr %s185, 64
          %s187 = scalar_lea.vmem [#allocation3], %s186
          %s188 = smul.u32 8, %s17
          %s190 = ssub.s32 1024, 1024
          %191 = vsyncadd %s184, %s190
          %s192 = smul.addr %s188, 2
          %s193 = smul.addr %s192, 64
          %s194 = scalar_lea.hbm %s0, %s193
          %s195 = sshll.u32 %s187, 4
          %s196 = int_to_ptr.vmem [resolvable:$true] %s195
          %201 = dma.hbm_to_vmem [thread:$0]  %s194, 1024, %s196, %s184, 64, 64, 4
        $region32: #{tpu_custom_call.1} parent=27 // pred_fallthru
          _
      $region28: #{tpu_custom_call.1} parent=5 // pred_fallthru
        _
      %p202 = scmp.le.s32.totalorder 1, %s17
      %p203 = scmp.lt.s32.totalorder %s17, 3
      %p204 = pnand %p202, %p203
      %p205 = pneg %p204
      // Predicated region
      $region33: #{tpu_custom_call.1} parent=5 // pred_check
        _
      $region34: #{tpu_custom_call.1} parent=5 // pred_check_branch
        %207 = sbr.rel (%p204) target = $region36
      $region35: #{tpu_custom_call.1} parent=5 // pred_region
        %s208 = ssub.s32 %s17, 1
        %s209 = sand.u32 %s30, 1
        %s210 = scalar_lea.sflag [#allocation4], %s209
        %s211 = sand.u32 %s30, 1
        %s212 = smul.addr %s211, 64
        %s213 = scalar_lea.vmem [#allocation3], %s212
        // Predicated region
        $region37: #{tpu_custom_call.1} parent=35 // pred_check
          %p214 = pneg %p43
        $region38: #{tpu_custom_call.1} parent=35 // pred_check_branch
          %216 = sbr.rel (%p214) target = $region40
        $region39: #{tpu_custom_call.1} parent=35 // pred_region
          %217 = dma.done %s210, 1024
        $region40: #{tpu_custom_call.1} parent=35 // pred_fallthru
          _
        // Predicated region
        $region41: #{tpu_custom_call.1} parent=35 // pred_check
          %p218 = pneg %p64
        $region42: #{tpu_custom_call.1} parent=35 // pred_check_branch
          %220 = sbr.rel (%p218) target = $region44
        $region43: #{tpu_custom_call.1} parent=35 // pred_region
          %221 = dma.done [#allocation7], 3072
        $region44: #{tpu_custom_call.1} parent=35 // pred_fallthru
          _
        // Predicated region
        $region45: #{tpu_custom_call.1} parent=35 // pred_check
          %p222 = pneg %p85
        $region46: #{tpu_custom_call.1} parent=35 // pred_check_branch
          %224 = sbr.rel (%p222) target = $region48
        $region47: #{tpu_custom_call.1} parent=35 // pred_region
          %225 = dma.done [#allocation7], 3072
        $region48: #{tpu_custom_call.1} parent=35 // pred_fallthru
          _
        %s226 = sand.u32 %s30, 1
        %s227 = scalar_lea.sflag [#allocation4], %s226
        %s228 = sand.u32 %s30, 1
        %s229 = smul.addr %s228, 64
        %s230 = scalar_lea.vmem [#allocation3], %s229
        %p231 = pneg %p43
        %p232 = pneg %p40
        %p233 = pneg %p64
        %p234 = pneg %p61
        %p235 = pneg %p85
        %p236 = pneg %p82
        %p237 = pneg %p106
        %p238 = pneg %p103
        %p239 = pneg %p132
        %p240 = pneg %p129
        %s241 = sand.u32 %s119, 1
        %s242 = scalar_lea.sflag [#allocation5], %s241
        %s243 = sand.u32 %s119, 1
        %s244 = smul.addr %s243, 128
        %s245 = scalar_lea.vmem [#allocation9], %s244
        %s246 = smul.u32 8, %s22
        %s247 = smul.u32 8, %s22
        %vm249 = vcmask 1040384
        %vm250 = vsmask.f32 256
        %vm251 = vmand %vm249, %vm250
        %v252 = vld [vmem:[#allocation2] sm:$0x1]
        %v253 = vsel %vm251, 0, %v252
        %254 = vst [vmem:[#allocation2] sm:$0x1] %v253
        %v255 = vld [vmem:[#allocation2 + $0xc] sm:$0x1]
        %v256 = vsel %vm251, 0, %v255
        %257 = vst [vmem:[#allocation2 + $0xc] sm:$0x1] %v256
        %v258 = vld [vmem:[#allocation2 + $0x18] sm:$0x1]
        %v259 = vsel %vm251, 0, %v258
        %260 = vst [vmem:[#allocation2 + $0x18] sm:$0x1] %v259
        %v261 = vld [vmem:[#allocation2 + $0x24] sm:$0x1]
        %v262 = vsel %vm251, 0, %v261
        %263 = vst [vmem:[#allocation2 + $0x24] sm:$0x1] %v262
        %v264 = vld [vmem:[#allocation2 + $0x30] sm:$0x1]
        %v265 = vsel %vm251, 0, %v264
        %266 = vst [vmem:[#allocation2 + $0x30] sm:$0x1] %v265
        %v267 = vld [vmem:[#allocation2 + $0x3c] sm:$0x1]
        %v268 = vsel %vm251, 0, %v267
        %269 = vst [vmem:[#allocation2 + $0x3c] sm:$0x1] %v268
        %v270 = vld [vmem:[#allocation2 + $0x48] sm:$0x1]
        %v271 = vsel %vm251, 0, %v270
        %272 = vst [vmem:[#allocation2 + $0x48] sm:$0x1] %v271
        %v273 = vld [vmem:[#allocation2 + $0x54] sm:$0x1]
        %v274 = vsel %vm251, 0, %v273
        %275 = vst [vmem:[#allocation2 + $0x54] sm:$0x1] %v274
        %vm276 = vsmask.f32 7938
        %vm277 = vmand %vm249, %vm276
        %v278 = vld [vmem:[#allocation2 + $0x8] sm:$0x1]
        %v279 = vsel %vm277, 0, %v278
        %280 = vst [vmem:[#allocation2 + $0x8] sm:$0x1] %v279
        %v281 = vld [vmem:[#allocation2 + $0x14] sm:$0x1]
        %v282 = vsel %vm277, 0, %v281
        %283 = vst [vmem:[#allocation2 + $0x14] sm:$0x1] %v282
        %v284 = vld [vmem:[#allocation2 + $0x20] sm:$0x1]
        %v285 = vsel %vm277, 0, %v284
        %286 = vst [vmem:[#allocation2 + $0x20] sm:$0x1] %v285
        %v287 = vld [vmem:[#allocation2 + $0x2c] sm:$0x1]
        %v288 = vsel %vm277, 0, %v287
        %289 = vst [vmem:[#allocation2 + $0x2c] sm:$0x1] %v288
        %v290 = vld [vmem:[#allocation2 + $0x38] sm:$0x1]
        %v291 = vsel %vm277, 0, %v290
        %292 = vst [vmem:[#allocation2 + $0x38] sm:$0x1] %v291
        %v293 = vld [vmem:[#allocation2 + $0x44] sm:$0x1]
        %v294 = vsel %vm277, 0, %v293
        %295 = vst [vmem:[#allocation2 + $0x44] sm:$0x1] %v294
        %v296 = vld [vmem:[#allocation2 + $0x50] sm:$0x1]
        %v297 = vsel %vm277, 0, %v296
        %298 = vst [vmem:[#allocation2 + $0x50] sm:$0x1] %v297
        %v299 = vld [vmem:[#allocation2 + $0x5c] sm:$0x1]
        %v300 = vsel %vm277, 0, %v299
        %301 = vst [vmem:[#allocation2 + $0x5c] sm:$0x1] %v300
        %v302 = vld [vmem:[%s213] sm:$0xf]
        %v303 = vld [vmem:[%s213 + $0x4] sm:$0xf]
        %v304 = vld [vmem:[%s213 + $0x8] sm:$0xf]
        %v305 = vld [vmem:[%s213 + $0xc] sm:$0xf]
        %v306 = vld [vmem:[%s213 + $0x10] sm:$0xf]
        %v307 = vld [vmem:[%s213 + $0x14] sm:$0xf]
        %v308 = vld [vmem:[%s213 + $0x18] sm:$0xf]
        %v309 = vld [vmem:[%s213 + $0x1c] sm:$0xf]
        %v310 = vld [vmem:[%s213 + $0x20] sm:$0xf]
        %v311 = vld [vmem:[%s213 + $0x24] sm:$0xf]
        %v312 = vld [vmem:[%s213 + $0x28] sm:$0xf]
        %v313 = vld [vmem:[%s213 + $0x2c] sm:$0xf]
        %v314 = vld [vmem:[%s213 + $0x30] sm:$0xf]
        %v315 = vld [vmem:[%s213 + $0x34] sm:$0xf]
        %v316 = vld [vmem:[%s213 + $0x38] sm:$0xf]
        %v317 = vld [vmem:[%s213 + $0x3c] sm:$0xf]
        %vm318 = vsmask.f32 4368
        %vm319 = vmor %vm250, %vm318
        %v321 = vshrl.u32 %v302, 16
        %v323 = vrot.slane %v321, 7
        %v324 = vshll.u32 %v302, 16
        %v326 = vor.u32 %v323, %v324
        %v327 = vrot.slane %v323, 4
        %v329 = vshrl.u32 %v303, 16
        %v331 = vrot.slane %v329, 7
        %v332 = vshll.u32 %v303, 16
        %v334 = vor.u32 %v331, %v332
        %v335 = vsel %vm319, %v327, %v334
        %v336 = vrot.slane %v331, 4
        %v338 = vshrl.u32 %v304, 16
        %v340 = vrot.slane %v338, 7
        %v341 = vshll.u32 %v304, 16
        %v343 = vor.u32 %v340, %v341
        %v344 = vrot.slane %v340, 4
        %v346 = vshrl.u32 %v305, 16
        %v348 = vrot.slane %v346, 7
        %v349 = vshll.u32 %v305, 16
        %v351 = vor.u32 %v348, %v349
        %v352 = vsel %vm319, %v344, %v351
        %v353 = vrot.slane %v348, 4
        %v355 = vshrl.u32 %v306, 16
        %v357 = vrot.slane %v355, 7
        %v358 = vshll.u32 %v306, 16
        %v360 = vor.u32 %v357, %v358
        %v361 = vrot.slane %v357, 4
        %v363 = vshrl.u32 %v307, 16
        %v365 = vrot.slane %v363, 7
        %v366 = vshll.u32 %v307, 16
        %v368 = vor.u32 %v365, %v366
        %v369 = vsel %vm319, %v361, %v368
        %v370 = vrot.slane %v365, 4
        %v372 = vshrl.u32 %v308, 16
        %v374 = vrot.slane %v372, 7
        %v375 = vshll.u32 %v308, 16
        %v377 = vor.u32 %v374, %v375
        %v378 = vrot.slane %v374, 4
        %v380 = vshrl.u32 %v309, 16
        %v382 = vrot.slane %v380, 7
        %v383 = vshll.u32 %v309, 16
        %v385 = vor.u32 %v382, %v383
        %v386 = vsel %vm319, %v378, %v385
        %v387 = vrot.slane %v382, 4
        %v389 = vshrl.u32 %v310, 16
        %v391 = vrot.slane %v389, 7
        %v392 = vshll.u32 %v310, 16
        %v394 = vor.u32 %v391, %v392
        %v395 = vrot.slane %v391, 4
        %v397 = vshrl.u32 %v311, 16
        %v399 = vrot.slane %v397, 7
        %v400 = vshll.u32 %v311, 16
        %v402 = vor.u32 %v399, %v400
        %v403 = vsel %vm319, %v395, %v402
        %v404 = vrot.slane %v399, 4
        %v406 = vshrl.u32 %v312, 16
        %v408 = vrot.slane %v406, 7
        %v409 = vshll.u32 %v312, 16
        %v411 = vor.u32 %v408, %v409
        %v412 = vrot.slane %v408, 4
        %v414 = vshrl.u32 %v313, 16
        %v416 = vrot.slane %v414, 7
        %v417 = vshll.u32 %v313, 16
        %v419 = vor.u32 %v416, %v417
        %v420 = vsel %vm319, %v412, %v419
        %v421 = vrot.slane %v416, 4
        %v423 = vshrl.u32 %v314, 16
        %v425 = vrot.slane %v423, 7
        %v426 = vshll.u32 %v314, 16
        %v428 = vor.u32 %v425, %v426
        %v429 = vrot.slane %v425, 4
        %v431 = vshrl.u32 %v315, 16
        %v433 = vrot.slane %v431, 7
        %v434 = vshll.u32 %v315, 16
        %v436 = vor.u32 %v433, %v434
        %v437 = vsel %vm319, %v429, %v436
        %v438 = vrot.slane %v433, 4
        %v440 = vshrl.u32 %v316, 16
        %v442 = vrot.slane %v440, 7
        %v443 = vshll.u32 %v316, 16
        %v445 = vor.u32 %v442, %v443
        %v446 = vrot.slane %v442, 4
        %v448 = vshrl.u32 %v317, 16
        %v450 = vrot.slane %v448, 7
        %v451 = vshll.u32 %v317, 16
        %v453 = vor.u32 %v450, %v451
        %v454 = vsel %vm319, %v446, %v453
        %v455 = vrot.slane %v450, 4
        %vm480 = vcmask 1043456
        %vm481 = vmand %vm480, %vm276
        %v482 = vld [vmem:[#allocation2] sm:$0xf]
        %v483 = vsel %vm481, %v326, %v482
        %484 = vst [vmem:[#allocation2] sm:$0xf] %v483
        %485 = vst [vmem:[#allocation2 + $0x4] sm:$0xf] %v335
        %v486 = vld [vmem:[#allocation2 + $0x8] sm:$0x1]
        %v487 = vsel %vm251, %v336, %v486
        %488 = vst [vmem:[#allocation2 + $0x8] sm:$0x1] %v487
        %v489 = vld [vmem:[#allocation2 + $0xc] sm:$0xf]
        %v490 = vsel %vm481, %v343, %v489
        %491 = vst [vmem:[#allocation2 + $0xc] sm:$0xf] %v490
        %492 = vst [vmem:[#allocation2 + $0x10] sm:$0xf] %v352
        %v493 = vld [vmem:[#allocation2 + $0x14] sm:$0x1]
        %v494 = vsel %vm251, %v353, %v493
        %495 = vst [vmem:[#allocation2 + $0x14] sm:$0x1] %v494
        %v496 = vld [vmem:[#allocation2 + $0x18] sm:$0xf]
        %v497 = vsel %vm481, %v360, %v496
        %498 = vst [vmem:[#allocation2 + $0x18] sm:$0xf] %v497
        %499 = vst [vmem:[#allocation2 + $0x1c] sm:$0xf] %v369
        %v500 = vld [vmem:[#allocation2 + $0x20] sm:$0x1]
        %v501 = vsel %vm251, %v370, %v500
        %502 = vst [vmem:[#allocation2 + $0x20] sm:$0x1] %v501
        %v503 = vld [vmem:[#allocation2 + $0x24] sm:$0xf]
        %v504 = vsel %vm481, %v377, %v503
        %505 = vst [vmem:[#allocation2 + $0x24] sm:$0xf] %v504
        %506 = vst [vmem:[#allocation2 + $0x28] sm:$0xf] %v386
        %v507 = vld [vmem:[#allocation2 + $0x2c] sm:$0x1]
        %v508 = vsel %vm251, %v387, %v507
        %509 = vst [vmem:[#allocation2 + $0x2c] sm:$0x1] %v508
        %v510 = vld [vmem:[#allocation2 + $0x30] sm:$0xf]
        %v511 = vsel %vm481, %v394, %v510
        %512 = vst [vmem:[#allocation2 + $0x30] sm:$0xf] %v511
        %513 = vst [vmem:[#allocation2 + $0x34] sm:$0xf] %v403
        %v514 = vld [vmem:[#allocation2 + $0x38] sm:$0x1]
        %v515 = vsel %vm251, %v404, %v514
        %516 = vst [vmem:[#allocation2 + $0x38] sm:$0x1] %v515
        %v517 = vld [vmem:[#allocation2 + $0x3c] sm:$0xf]
        %v518 = vsel %vm481, %v411, %v517
        %519 = vst [vmem:[#allocation2 + $0x3c] sm:$0xf] %v518
        %520 = vst [vmem:[#allocation2 + $0x40] sm:$0xf] %v420
        %v521 = vld [vmem:[#allocation2 + $0x44] sm:$0x1]
        %v522 = vsel %vm251, %v421, %v521
        %523 = vst [vmem:[#allocation2 + $0x44] sm:$0x1] %v522
        %v524 = vld [vmem:[#allocation2 + $0x48] sm:$0xf]
        %v525 = vsel %vm481, %v428, %v524
        %526 = vst [vmem:[#allocation2 + $0x48] sm:$0xf] %v525
        %527 = vst [vmem:[#allocation2 + $0x4c] sm:$0xf] %v437
        %v528 = vld [vmem:[#allocation2 + $0x50] sm:$0x1]
        %v529 = vsel %vm251, %v438, %v528
        %530 = vst [vmem:[#allocation2 + $0x50] sm:$0x1] %v529
        %v531 = vld [vmem:[#allocation2 + $0x54] sm:$0xf]
        %v532 = vsel %vm481, %v445, %v531
        %533 = vst [vmem:[#allocation2 + $0x54] sm:$0xf] %v532
        %534 = vst [vmem:[#allocation2 + $0x58] sm:$0xf] %v454
        %v535 = vld [vmem:[#allocation2 + $0x5c] sm:$0x1]
        %v536 = vsel %vm251, %v455, %v535
        %537 = vst [vmem:[#allocation2 + $0x5c] sm:$0x1] %v536
        %v538 = vld [vmem:[%s3] sm:$0x1]
        %v539 = vld [vmem:[%s3 + $0x1] sm:$0x1]
        %v540 = vld [vmem:[%s3 + $0x2] sm:$0x1]
        %v541 = vld [vmem:[%s3 + $0x3] sm:$0x1]
        %v542 = vld [vmem:[#allocation2] sm:$0xf]
        %v543 = vld [vmem:[#allocation2 + $0x4] sm:$0xf]
        %v544 = vld [vmem:[#allocation2 + $0xc] sm:$0xf]
        %v545 = vld [vmem:[#allocation2 + $0x10] sm:$0xf]
        %v546 = vld [vmem:[#allocation2 + $0x18] sm:$0xf]
        %v547 = vld [vmem:[#allocation2 + $0x1c] sm:$0xf]
        %v548 = vld [vmem:[#allocation2 + $0x24] sm:$0xf]
        %v549 = vld [vmem:[#allocation2 + $0x28] sm:$0xf]
        %v550 = vld [vmem:[#allocation2 + $0x30] sm:$0xf]
        %v551 = vld [vmem:[#allocation2 + $0x34] sm:$0xf]
        %v552 = vld [vmem:[#allocation2 + $0x3c] sm:$0xf]
        %v553 = vld [vmem:[#allocation2 + $0x40] sm:$0xf]
        %v554 = vld [vmem:[#allocation2 + $0x48] sm:$0xf]
        %v555 = vld [vmem:[#allocation2 + $0x4c] sm:$0xf]
        %v556 = vld [vmem:[#allocation2 + $0x54] sm:$0xf]
        %v557 = vld [vmem:[#allocation2 + $0x58] sm:$0xf]
        %v558 = vld [vmem:[#allocation2 + $0x8] sm:$0x1]
        %v559 = vld [vmem:[#allocation2 + $0x14] sm:$0x1]
        %v560 = vld [vmem:[#allocation2 + $0x20] sm:$0x1]
        %v561 = vld [vmem:[#allocation2 + $0x2c] sm:$0x1]
        %v562 = vld [vmem:[#allocation2 + $0x38] sm:$0x1]
        %v563 = vld [vmem:[#allocation2 + $0x44] sm:$0x1]
        %v564 = vld [vmem:[#allocation2 + $0x50] sm:$0x1]
        %v565 = vld [vmem:[#allocation2 + $0x5c] sm:$0x1]
        %v566 = vld [vmem:[#allocation2] sm:$0xe]
        %v567 = vld [vmem:[#allocation2 + $0xc] sm:$0xe]
        %v568 = vld [vmem:[#allocation2 + $0x18] sm:$0xe]
        %v569 = vld [vmem:[#allocation2 + $0x24] sm:$0xe]
        %v570 = vld [vmem:[#allocation2 + $0x30] sm:$0xe]
        %v571 = vld [vmem:[#allocation2 + $0x3c] sm:$0xe]
        %v572 = vld [vmem:[#allocation2 + $0x48] sm:$0xe]
        %v573 = vld [vmem:[#allocation2 + $0x54] sm:$0xe]
        %v590 = vunpack.c.l.b16 %v542
        %v591 = vunpack.c.l.b16 %v543
        %v592 = vunpack.c.l.b16 %v544
        %v593 = vunpack.c.l.b16 %v545
        %v594 = vunpack.c.l.b16 %v546
        %v595 = vunpack.c.l.b16 %v547
        %v596 = vunpack.c.l.b16 %v548
        %v597 = vunpack.c.l.b16 %v549
        %v598 = vunpack.c.l.b16 %v550
        %v599 = vunpack.c.l.b16 %v551
        %v600 = vunpack.c.l.b16 %v552
        %v601 = vunpack.c.l.b16 %v553
        %v602 = vunpack.c.l.b16 %v554
        %v603 = vunpack.c.l.b16 %v555
        %v604 = vunpack.c.l.b16 %v556
        %v605 = vunpack.c.l.b16 %v557
        %v606 = vpack.c.b16 %v591, %v590
        %v607 = vpack.c.b16 %v593, %v592
        %v608 = vpack.c.b16 %v595, %v594
        %v609 = vpack.c.b16 %v597, %v596
        %v610 = vpack.c.b16 %v599, %v598
        %v611 = vpack.c.b16 %v601, %v600
        %v612 = vpack.c.b16 %v603, %v602
        %v613 = vpack.c.b16 %v605, %v604
        %v630 = vunpack.c.l.b16 %v558
        %v631 = vunpack.c.l.b16 %v559
        %v632 = vunpack.c.l.b16 %v560
        %v633 = vunpack.c.l.b16 %v561
        %v634 = vunpack.c.l.b16 %v562
        %v635 = vunpack.c.l.b16 %v563
        %v636 = vunpack.c.l.b16 %v564
        %v637 = vunpack.c.l.b16 %v565
        %v638 = vpack.c.b16 %v630, %v630
        %v639 = vpack.c.b16 %v631, %v631
        %v640 = vpack.c.b16 %v632, %v632
        %v641 = vpack.c.b16 %v633, %v633
        %v642 = vpack.c.b16 %v634, %v634
        %v643 = vpack.c.b16 %v635, %v635
        %v644 = vpack.c.b16 %v636, %v636
        %v645 = vpack.c.b16 %v637, %v637
        %vm646 = vsmask.f32 7424
        %v648 = vshrl.u32 %v606, 16
        %v650 = vshll.u32 %v606, 16
        %v652 = vrot.slane %v650, 1
        %v653 = vor.u32 %v648, %v652
        %v655 = vshll.u32 %v638, 16
        %v657 = vrot.slane %v655, 1
        %v658 = vsel %vm646, %v653, %v657
        %v660 = vshrl.u32 %v607, 16
        %v662 = vshll.u32 %v607, 16
        %v664 = vrot.slane %v662, 1
        %v665 = vor.u32 %v660, %v664
        %v667 = vshll.u32 %v639, 16
        %v669 = vrot.slane %v667, 1
        %v670 = vsel %vm646, %v665, %v669
        %v672 = vshrl.u32 %v608, 16
        %v674 = vshll.u32 %v608, 16
        %v676 = vrot.slane %v674, 1
        %v677 = vor.u32 %v672, %v676
        %v679 = vshll.u32 %v640, 16
        %v681 = vrot.slane %v679, 1
        %v682 = vsel %vm646, %v677, %v681
        %v684 = vshrl.u32 %v609, 16
        %v686 = vshll.u32 %v609, 16
        %v688 = vrot.slane %v686, 1
        %v689 = vor.u32 %v684, %v688
        %v691 = vshll.u32 %v641, 16
        %v693 = vrot.slane %v691, 1
        %v694 = vsel %vm646, %v689, %v693
        %v696 = vshrl.u32 %v610, 16
        %v698 = vshll.u32 %v610, 16
        %v700 = vrot.slane %v698, 1
        %v701 = vor.u32 %v696, %v700
        %v703 = vshll.u32 %v642, 16
        %v705 = vrot.slane %v703, 1
        %v706 = vsel %vm646, %v701, %v705
        %v708 = vshrl.u32 %v611, 16
        %v710 = vshll.u32 %v611, 16
        %v712 = vrot.slane %v710, 1
        %v713 = vor.u32 %v708, %v712
        %v715 = vshll.u32 %v643, 16
        %v717 = vrot.slane %v715, 1
        %v718 = vsel %vm646, %v713, %v717
        %v720 = vshrl.u32 %v612, 16
        %v722 = vshll.u32 %v612, 16
        %v724 = vrot.slane %v722, 1
        %v725 = vor.u32 %v720, %v724
        %v727 = vshll.u32 %v644, 16
        %v729 = vrot.slane %v727, 1
        %v730 = vsel %vm646, %v725, %v729
        %v732 = vshrl.u32 %v613, 16
        %v734 = vshll.u32 %v613, 16
        %v736 = vrot.slane %v734, 1
        %v737 = vor.u32 %v732, %v736
        %v739 = vshll.u32 %v645, 16
        %v741 = vrot.slane %v739, 1
        %v742 = vsel %vm646, %v737, %v741
        %v759 = vunpack.c.l.b16 %v566
        %v760 = vunpack.c.l.b16 %v567
        %v761 = vunpack.c.l.b16 %v568
        %v762 = vunpack.c.l.b16 %v569
        %v763 = vunpack.c.l.b16 %v570
        %v764 = vunpack.c.l.b16 %v571
        %v765 = vunpack.c.l.b16 %v572
        %v766 = vunpack.c.l.b16 %v573
        %v767 = vpack.c.b16 %v591, %v759
        %v768 = vpack.c.b16 %v593, %v760
        %v769 = vpack.c.b16 %v595, %v761
        %v770 = vpack.c.b16 %v597, %v762
        %v771 = vpack.c.b16 %v599, %v763
        %v772 = vpack.c.b16 %v601, %v764
        %v773 = vpack.c.b16 %v603, %v765
        %v774 = vpack.c.b16 %v605, %v766
        %vm775 = vcmask 1046528
        %v776 = vrot.slane %v767, 1
        %v777 = vrot.slane %v638, 1
        %v778 = vsel %vm775, %v776, %v777
        %v779 = vrot.slane %v768, 1
        %v780 = vrot.slane %v639, 1
        %v781 = vsel %vm775, %v779, %v780
        %v782 = vrot.slane %v769, 1
        %v783 = vrot.slane %v640, 1
        %v784 = vsel %vm775, %v782, %v783
        %v785 = vrot.slane %v770, 1
        %v786 = vrot.slane %v641, 1
        %v787 = vsel %vm775, %v785, %v786
        %v788 = vrot.slane %v771, 1
        %v789 = vrot.slane %v642, 1
        %v790 = vsel %vm775, %v788, %v789
        %v791 = vrot.slane %v772, 1
        %v792 = vrot.slane %v643, 1
        %v793 = vsel %vm775, %v791, %v792
        %v794 = vrot.slane %v773, 1
        %v795 = vrot.slane %v644, 1
        %v796 = vsel %vm775, %v794, %v795
        %v797 = vrot.slane %v774, 1
        %v798 = vrot.slane %v645, 1
        %v799 = vsel %vm775, %v797, %v798
        %v808 = vld [vmem:[#allocation6] sm:$0xf]
        %v809 = vld [vmem:[#allocation6 + $0x4] sm:$0xf]
        %v810 = vld [vmem:[#allocation6 + $0x8] sm:$0xf]
        %v811 = vld [vmem:[#allocation6 + $0xc] sm:$0xf]
        %v812 = vld [vmem:[#allocation6 + $0x10] sm:$0xf]
        %v813 = vld [vmem:[#allocation6 + $0x14] sm:$0xf]
        %v814 = vld [vmem:[#allocation6 + $0x18] sm:$0xf]
        %v815 = vld [vmem:[#allocation6 + $0x1c] sm:$0xf]
        %v816 = vld [vmem:[#allocation6 + $0x20] sm:$0xf]
        %v817 = vld [vmem:[#allocation6 + $0x24] sm:$0xf]
        %v818 = vld [vmem:[#allocation6 + $0x28] sm:$0xf]
        %v819 = vld [vmem:[#allocation6 + $0x2c] sm:$0xf]
        %v820 = vld [vmem:[#allocation6 + $0x30] sm:$0xf]
        %v821 = vld [vmem:[#allocation6 + $0x34] sm:$0xf]
        %v822 = vld [vmem:[#allocation6 + $0x38] sm:$0xf]
        %v823 = vld [vmem:[#allocation6 + $0x3c] sm:$0xf]
        %v824 = vld [vmem:[#allocation6 + $0x40] sm:$0xf]
        %v825 = vld [vmem:[#allocation6 + $0x44] sm:$0xf]
        %v826 = vld [vmem:[#allocation6 + $0x48] sm:$0xf]
        %v827 = vld [vmem:[#allocation6 + $0x4c] sm:$0xf]
        %v828 = vld [vmem:[#allocation6 + $0x50] sm:$0xf]
        %v829 = vld [vmem:[#allocation6 + $0x54] sm:$0xf]
        %v830 = vld [vmem:[#allocation6 + $0x58] sm:$0xf]
        %v831 = vld [vmem:[#allocation6 + $0x5c] sm:$0xf]
        %v832 = vld [vmem:[#allocation6 + $0x60] sm:$0xf]
        %v833 = vld [vmem:[#allocation6 + $0x64] sm:$0xf]
        %v834 = vld [vmem:[#allocation6 + $0x68] sm:$0xf]
        %v835 = vld [vmem:[#allocation6 + $0x6c] sm:$0xf]
        %v836 = vld [vmem:[#allocation6 + $0x70] sm:$0xf]
        %v837 = vld [vmem:[#allocation6 + $0x74] sm:$0xf]
        %v838 = vld [vmem:[#allocation6 + $0x78] sm:$0xf]
        %v839 = vld [vmem:[#allocation6 + $0x7c] sm:$0xf]
        %v840 = vld [vmem:[#allocation6 + $0x80] sm:$0xf]
        %v841 = vld [vmem:[#allocation6 + $0x84] sm:$0xf]
        %v842 = vld [vmem:[#allocation6 + $0x88] sm:$0xf]
        %v843 = vld [vmem:[#allocation6 + $0x8c] sm:$0xf]
        %v844 = vld [vmem:[#allocation6 + $0x90] sm:$0xf]
        %v845 = vld [vmem:[#allocation6 + $0x94] sm:$0xf]
        %v846 = vld [vmem:[#allocation6 + $0x98] sm:$0xf]
        %v847 = vld [vmem:[#allocation6 + $0x9c] sm:$0xf]
        %v848 = vld [vmem:[#allocation6 + $0xa0] sm:$0xf]
        %v849 = vld [vmem:[#allocation6 + $0xa4] sm:$0xf]
        %v850 = vld [vmem:[#allocation6 + $0xa8] sm:$0xf]
        %v851 = vld [vmem:[#allocation6 + $0xac] sm:$0xf]
        %v852 = vld [vmem:[#allocation6 + $0xb0] sm:$0xf]
        %v853 = vld [vmem:[#allocation6 + $0xb4] sm:$0xf]
        %v854 = vld [vmem:[#allocation6 + $0xb8] sm:$0xf]
        %v855 = vld [vmem:[#allocation6 + $0xbc] sm:$0xf]
        %v904 = vunpack.c.l.b16 %v808
        %v905 = vunpack.c.l.b16 %v809
        %v906 = vunpack.c.l.b16 %v810
        %v907 = vunpack.c.l.b16 %v811
        %v908 = vunpack.c.l.b16 %v812
        %v909 = vunpack.c.l.b16 %v813
        %v910 = vunpack.c.l.b16 %v814
        %v911 = vunpack.c.l.b16 %v815
        %v912 = vunpack.c.l.b16 %v816
        %v913 = vunpack.c.l.b16 %v817
        %v914 = vunpack.c.l.b16 %v818
        %v915 = vunpack.c.l.b16 %v819
        %v916 = vunpack.c.l.b16 %v820
        %v917 = vunpack.c.l.b16 %v821
        %v918 = vunpack.c.l.b16 %v822
        %v919 = vunpack.c.l.b16 %v823
        %v920 = vunpack.c.l.b16 %v824
        %v921 = vunpack.c.l.b16 %v825
        %v922 = vunpack.c.l.b16 %v826
        %v923 = vunpack.c.l.b16 %v827
        %v924 = vunpack.c.l.b16 %v828
        %v925 = vunpack.c.l.b16 %v829
        %v926 = vunpack.c.l.b16 %v830
        %v927 = vunpack.c.l.b16 %v831
        %v928 = vunpack.c.l.b16 %v832
        %v929 = vunpack.c.l.b16 %v833
        %v930 = vunpack.c.l.b16 %v834
        %v931 = vunpack.c.l.b16 %v835
        %v932 = vunpack.c.l.b16 %v836
        %v933 = vunpack.c.l.b16 %v837
        %v934 = vunpack.c.l.b16 %v838
        %v935 = vunpack.c.l.b16 %v839
        %v936 = vunpack.c.l.b16 %v840
        %v937 = vunpack.c.l.b16 %v841
        %v938 = vunpack.c.l.b16 %v842
        %v939 = vunpack.c.l.b16 %v843
        %v940 = vunpack.c.l.b16 %v844
        %v941 = vunpack.c.l.b16 %v845
        %v942 = vunpack.c.l.b16 %v846
        %v943 = vunpack.c.l.b16 %v847
        %v944 = vunpack.c.l.b16 %v848
        %v945 = vunpack.c.l.b16 %v849
        %v946 = vunpack.c.l.b16 %v850
        %v947 = vunpack.c.l.b16 %v851
        %v948 = vunpack.c.l.b16 %v852
        %v949 = vunpack.c.l.b16 %v853
        %v950 = vunpack.c.l.b16 %v854
        %v951 = vunpack.c.l.b16 %v855
        %v952 = vpack.c.b16 %v905, %v904
        %v953 = vpack.c.b16 %v907, %v906
        %v954 = vpack.c.b16 %v909, %v908
        %v955 = vpack.c.b16 %v911, %v910
        %v956 = vpack.c.b16 %v913, %v912
        %v957 = vpack.c.b16 %v915, %v914
        %v958 = vpack.c.b16 %v917, %v916
        %v959 = vpack.c.b16 %v919, %v918
        %v960 = vpack.c.b16 %v921, %v920
        %v961 = vpack.c.b16 %v923, %v922
        %v962 = vpack.c.b16 %v925, %v924
        %v963 = vpack.c.b16 %v927, %v926
        %v964 = vpack.c.b16 %v929, %v928
        %v965 = vpack.c.b16 %v931, %v930
        %v966 = vpack.c.b16 %v933, %v932
        %v967 = vpack.c.b16 %v935, %v934
        %v968 = vpack.c.b16 %v937, %v936
        %v969 = vpack.c.b16 %v939, %v938
        %v970 = vpack.c.b16 %v941, %v940
        %v971 = vpack.c.b16 %v943, %v942
        %v972 = vpack.c.b16 %v945, %v944
        %v973 = vpack.c.b16 %v947, %v946
        %v974 = vpack.c.b16 %v949, %v948
        %v975 = vpack.c.b16 %v951, %v950
        %1000 = vmatprep.subr.bf16.mxu0 0
        %1001 = vmatpush1.bf16.msra.mxu0 %v959
        %1002 = vmatprep.subr.bf16.mxu0 0
        %1003 = vmatpush1.bf16.msra.mxu0 %v958
        %1004 = vmatprep.subr.bf16.mxu0 0
        %1005 = vmatpush1.bf16.msra.mxu0 %v957
        %1006 = vmatprep.subr.bf16.mxu0 0
        %1007 = vmatpush1.bf16.msra.mxu0 %v956
        %1008 = vmatprep.subr.bf16.mxu0 0
        %1009 = vmatpush1.bf16.msra.mxu0 %v955
        %1010 = vmatprep.subr.bf16.mxu0 0
        %1011 = vmatpush1.bf16.msra.mxu0 %v954
        %1012 = vmatprep.subr.bf16.mxu0 0
        %1013 = vmatpush1.bf16.msra.mxu0 %v953
        %1014 = vmatprep.subr.bf16.mxu0 0
        %1015 = vmatpush1.bf16.msra.mxu0 %v952
        %1016 = vmatprep.subr.bf16.mxu0 0
        %1017 = vmatpush2.bf16.msra.mxu0 %v967
        %1018 = vmatprep.subr.bf16.mxu0 0
        %1019 = vmatpush2.bf16.msra.mxu0 %v966
        %1020 = vmatprep.subr.bf16.mxu0 0
        %1021 = vmatpush2.bf16.msra.mxu0 %v965
        %1022 = vmatprep.subr.bf16.mxu0 0
        %1023 = vmatpush2.bf16.msra.mxu0 %v964
        %1024 = vmatprep.subr.bf16.mxu0 0
        %1025 = vmatpush2.bf16.msra.mxu0 %v963
        %1026 = vmatprep.subr.bf16.mxu0 0
        %1027 = vmatpush2.bf16.msra.mxu0 %v962
        %1028 = vmatprep.subr.bf16.mxu0 0
        %1029 = vmatpush2.bf16.msra.mxu0 %v961
        %1030 = vmatprep.subr.bf16.mxu0 0
        %1031 = vmatpush2.bf16.msra.mxu0 %v960
        %1032 = vmatprep.mubr.bf16.mxu0 %v658
        %1033 = vmatmul.mubr.bf16.gmra.mxu0 %v606
        %v1034 = vpop.f32.mrf.mxu0
        %v1035 = vadd.f32 0.0, %v1034
        %v1036 = vpop.f32.mrf.mxu0
        %v1037 = vpop.f32.mrf.mxu0
        %v1038 = vadd.f32 0.0, %v1037
        %v1039 = vpop.f32.mrf.mxu0
        %1040 = vmatprep.mubr.bf16.mxu0 %v670
        %1041 = vmatmul.mubr.bf16.gmra.mxu0 %v607
        %v1042 = vpop.f32.mrf.mxu0
        %v1043 = vadd.f32 0.0, %v1042
        %v1044 = vpop.f32.mrf.mxu0
        %v1045 = vpop.f32.mrf.mxu0
        %v1046 = vadd.f32 0.0, %v1045
        %v1047 = vpop.f32.mrf.mxu0
        %1048 = vmatprep.mubr.bf16.mxu0 %v682
        %1049 = vmatmul.mubr.bf16.gmra.mxu0 %v608
        %v1050 = vpop.f32.mrf.mxu0
        %v1051 = vadd.f32 0.0, %v1050
        %v1052 = vpop.f32.mrf.mxu0
        %v1053 = vpop.f32.mrf.mxu0
        %v1054 = vadd.f32 0.0, %v1053
        %v1055 = vpop.f32.mrf.mxu0
        %1056 = vmatprep.mubr.bf16.mxu0 %v694
        %1057 = vmatmul.mubr.bf16.gmra.mxu0 %v609
        %v1058 = vpop.f32.mrf.mxu0
        %v1059 = vadd.f32 0.0, %v1058
        %v1060 = vpop.f32.mrf.mxu0
        %v1061 = vpop.f32.mrf.mxu0
        %v1062 = vadd.f32 0.0, %v1061
        %v1063 = vpop.f32.mrf.mxu0
        %1064 = vmatprep.mubr.bf16.mxu0 %v706
        %1065 = vmatmul.mubr.bf16.gmra.mxu0 %v610
        %v1066 = vpop.f32.mrf.mxu0
        %v1067 = vadd.f32 0.0, %v1066
        %v1068 = vpop.f32.mrf.mxu0
        %v1069 = vpop.f32.mrf.mxu0
        %v1070 = vadd.f32 0.0, %v1069
        %v1071 = vpop.f32.mrf.mxu0
        %1072 = vmatprep.mubr.bf16.mxu0 %v718
        %1073 = vmatmul.mubr.bf16.gmra.mxu0 %v611
        %v1074 = vpop.f32.mrf.mxu0
        %v1075 = vadd.f32 0.0, %v1074
        %v1076 = vpop.f32.mrf.mxu0
        %v1077 = vpop.f32.mrf.mxu0
        %v1078 = vadd.f32 0.0, %v1077
        %v1079 = vpop.f32.mrf.mxu0
        %1080 = vmatprep.mubr.bf16.mxu0 %v730
        %1081 = vmatmul.mubr.bf16.gmra.mxu0 %v612
        %v1082 = vpop.f32.mrf.mxu0
        %v1083 = vadd.f32 0.0, %v1082
        %v1084 = vpop.f32.mrf.mxu0
        %v1085 = vpop.f32.mrf.mxu0
        %v1086 = vadd.f32 0.0, %v1085
        %v1087 = vpop.f32.mrf.mxu0
        %1088 = vmatprep.mubr.bf16.mxu0 %v742
        %1089 = vmatmul.mubr.bf16.gmra.mxu0 %v613
        %v1090 = vpop.f32.mrf.mxu0
        %v1091 = vadd.f32 0.0, %v1090
        %v1092 = vpop.f32.mrf.mxu0
        %v1093 = vpop.f32.mrf.mxu0
        %v1094 = vadd.f32 0.0, %v1093
        %v1095 = vpop.f32.mrf.mxu0
        %1096 = vdwg.mxu0
        %1097 = vmatprep.subr.bf16.mxu0 0
        %1098 = vmatpush1.bf16.msra.mxu0 %v975
        %1099 = vmatprep.subr.bf16.mxu0 0
        %1100 = vmatpush1.bf16.msra.mxu0 %v974
        %1101 = vmatprep.subr.bf16.mxu0 0
        %1102 = vmatpush1.bf16.msra.mxu0 %v973
        %1103 = vmatprep.subr.bf16.mxu0 0
        %1104 = vmatpush1.bf16.msra.mxu0 %v972
        %1105 = vmatprep.subr.bf16.mxu0 0
        %1106 = vmatpush1.bf16.msra.mxu0 %v971
        %1107 = vmatprep.subr.bf16.mxu0 0
        %1108 = vmatpush1.bf16.msra.mxu0 %v970
        %1109 = vmatprep.subr.bf16.mxu0 0
        %1110 = vmatpush1.bf16.msra.mxu0 %v969
        %1111 = vmatprep.subr.bf16.mxu0 0
        %1112 = vmatpush1.bf16.msra.mxu0 %v968
        %1113 = vmatprep.subr.bf16.mxu0 0
        %1114 = vmatpush2.bf16.msra.mxu0 0
        %1115 = vmatprep.subr.bf16.mxu0 0
        %1116 = vmatpush2.bf16.msra.mxu0 0
        %1117 = vmatprep.subr.bf16.mxu0 0
        %1118 = vmatpush2.bf16.msra.mxu0 0
        %1119 = vmatprep.subr.bf16.mxu0 0
        %1120 = vmatpush2.bf16.msra.mxu0 0
        %1121 = vmatprep.subr.bf16.mxu0 0
        %1122 = vmatpush2.bf16.msra.mxu0 0
        %1123 = vmatprep.subr.bf16.mxu0 0
        %1124 = vmatpush2.bf16.msra.mxu0 0
        %1125 = vmatprep.subr.bf16.mxu0 0
        %1126 = vmatpush2.bf16.msra.mxu0 0
        %1127 = vmatprep.subr.bf16.mxu0 0
        %1128 = vmatpush2.bf16.msra.mxu0 0
        %1129 = vmatprep.mubr.bf16.mxu0 0
        %1130 = vmatmul.mubr.bf16.gmra.mxu0 %v778
        %v1131 = vpop.f32.mrf.mxu0
        %v1132 = vadd.f32 %v1035, %v1131
        %v1133 = vpop.f32.mrf.mxu0
        %v1134 = vpop.f32.mrf.mxu0
        %v1135 = vadd.f32 %v1038, %v1134
        %v1136 = vpop.f32.mrf.mxu0
        %1137 = vmatprep.mubr.bf16.mxu0 0
        %1138 = vmatmul.mubr.bf16.gmra.mxu0 %v781
        %v1139 = vpop.f32.mrf.mxu0
        %v1140 = vadd.f32 %v1043, %v1139
        %v1141 = vpop.f32.mrf.mxu0
        %v1142 = vpop.f32.mrf.mxu0
        %v1143 = vadd.f32 %v1046, %v1142
        %v1144 = vpop.f32.mrf.mxu0
        %1145 = vmatprep.mubr.bf16.mxu0 0
        %1146 = vmatmul.mubr.bf16.gmra.mxu0 %v784
        %v1147 = vpop.f32.mrf.mxu0
        %v1148 = vadd.f32 %v1051, %v1147
        %v1149 = vpop.f32.mrf.mxu0
        %v1150 = vpop.f32.mrf.mxu0
        %v1151 = vadd.f32 %v1054, %v1150
        %v1152 = vpop.f32.mrf.mxu0
        %1153 = vmatprep.mubr.bf16.mxu0 0
        %1154 = vmatmul.mubr.bf16.gmra.mxu0 %v787
        %v1155 = vpop.f32.mrf.mxu0
        %v1156 = vadd.f32 %v1059, %v1155
        %v1157 = vpop.f32.mrf.mxu0
        %v1158 = vpop.f32.mrf.mxu0
        %v1159 = vadd.f32 %v1062, %v1158
        %v1160 = vpop.f32.mrf.mxu0
        %1161 = vmatprep.mubr.bf16.mxu0 0
        %1162 = vmatmul.mubr.bf16.gmra.mxu0 %v790
        %v1163 = vpop.f32.mrf.mxu0
        %v1164 = vadd.f32 %v1067, %v1163
        %v1165 = vpop.f32.mrf.mxu0
        %v1166 = vpop.f32.mrf.mxu0
        %v1167 = vadd.f32 %v1070, %v1166
        %v1168 = vpop.f32.mrf.mxu0
        %1169 = vmatprep.mubr.bf16.mxu0 0
        %1170 = vmatmul.mubr.bf16.gmra.mxu0 %v793
        %v1171 = vpop.f32.mrf.mxu0
        %v1172 = vadd.f32 %v1075, %v1171
        %v1173 = vpop.f32.mrf.mxu0
        %v1174 = vpop.f32.mrf.mxu0
        %v1175 = vadd.f32 %v1078, %v1174
        %v1176 = vpop.f32.mrf.mxu0
        %1177 = vmatprep.mubr.bf16.mxu0 0
        %1178 = vmatmul.mubr.bf16.gmra.mxu0 %v796
        %v1179 = vpop.f32.mrf.mxu0
        %v1180 = vadd.f32 %v1083, %v1179
        %v1181 = vpop.f32.mrf.mxu0
        %v1182 = vpop.f32.mrf.mxu0
        %v1183 = vadd.f32 %v1086, %v1182
        %v1184 = vpop.f32.mrf.mxu0
        %1185 = vmatprep.mubr.bf16.mxu0 0
        %1186 = vmatmul.mubr.bf16.gmra.mxu0 %v799
        %v1187 = vpop.f32.mrf.mxu0
        %v1188 = vadd.f32 %v1091, %v1187
        %v1189 = vpop.f32.mrf.mxu0
        %v1190 = vpop.f32.mrf.mxu0
        %v1191 = vadd.f32 %v1094, %v1190
        %v1192 = vpop.f32.mrf.mxu0
        %1193 = vdwg.mxu0
        %v1194 = vlaneseq
        %v1195 = vshrl.u32 %v1194, 7
        %v1196 = vsub.s32 0, %v1195
        %v1197 = vrot.slane %v538, %v1196
        %v1198 = vmul.f32 %v1132, %v1197
        %v1199 = vmul.f32 %v1135, %v1197
        %v1200 = vmul.f32 %v1140, %v1197
        %v1201 = vmul.f32 %v1143, %v1197
        %v1202 = vmul.f32 %v1148, %v1197
        %v1203 = vmul.f32 %v1151, %v1197
        %v1204 = vmul.f32 %v1156, %v1197
        %v1205 = vmul.f32 %v1159, %v1197
        %v1206 = vmul.f32 %v1164, %v1197
        %v1207 = vmul.f32 %v1167, %v1197
        %v1208 = vmul.f32 %v1172, %v1197
        %v1209 = vmul.f32 %v1175, %v1197
        %v1210 = vmul.f32 %v1180, %v1197
        %v1211 = vmul.f32 %v1183, %v1197
        %v1212 = vmul.f32 %v1188, %v1197
        %v1213 = vmul.f32 %v1191, %v1197
        %v1214 = vlaneseq
        %v1215 = vshrl.u32 %v1214, 7
        %v1216 = vsub.s32 0, %v1215
        %v1217 = vrot.slane %v539, %v1216
        %v1218 = vadd.f32 %v1198, %v1217
        %v1219 = vadd.f32 %v1199, %v1217
        %v1220 = vadd.f32 %v1200, %v1217
        %v1221 = vadd.f32 %v1201, %v1217
        %v1222 = vadd.f32 %v1202, %v1217
        %v1223 = vadd.f32 %v1203, %v1217
        %v1224 = vadd.f32 %v1204, %v1217
        %v1225 = vadd.f32 %v1205, %v1217
        %v1226 = vadd.f32 %v1206, %v1217
        %v1227 = vadd.f32 %v1207, %v1217
        %v1228 = vadd.f32 %v1208, %v1217
        %v1229 = vadd.f32 %v1209, %v1217
        %v1230 = vadd.f32 %v1210, %v1217
        %v1231 = vadd.f32 %v1211, %v1217
        %v1232 = vadd.f32 %v1212, %v1217
        %v1233 = vadd.f32 %v1213, %v1217
        %v1234 = vmax.f32 %v1218, 0.0
        %v1235 = vmax.f32 %v1219, 0.0
        %v1236 = vmax.f32 %v1220, 0.0
        %v1237 = vmax.f32 %v1221, 0.0
        %v1238 = vmax.f32 %v1222, 0.0
        %v1239 = vmax.f32 %v1223, 0.0
        %v1240 = vmax.f32 %v1224, 0.0
        %v1241 = vmax.f32 %v1225, 0.0
        %v1242 = vmax.f32 %v1226, 0.0
        %v1243 = vmax.f32 %v1227, 0.0
        %v1244 = vmax.f32 %v1228, 0.0
        %v1245 = vmax.f32 %v1229, 0.0
        %v1246 = vmax.f32 %v1230, 0.0
        %v1247 = vmax.f32 %v1231, 0.0
        %v1248 = vmax.f32 %v1232, 0.0
        %v1249 = vmax.f32 %v1233, 0.0
        %v1250 = vpack.c.bf16 %v1235, %v1234
        %v1251 = vpack.c.bf16 %v1237, %v1236
        %v1252 = vpack.c.bf16 %v1239, %v1238
        %v1253 = vpack.c.bf16 %v1241, %v1240
        %v1254 = vpack.c.bf16 %v1243, %v1242
        %v1255 = vpack.c.bf16 %v1245, %v1244
        %v1256 = vpack.c.bf16 %v1247, %v1246
        %v1257 = vpack.c.bf16 %v1249, %v1248
        %v1266 = vunpack.c.l.b16 %v1250
        %v1267 = vunpack.c.h.b16 %v1250
        %v1268 = vunpack.c.l.b16 %v1251
        %v1269 = vunpack.c.h.b16 %v1251
        %v1270 = vunpack.c.l.b16 %v1252
        %v1271 = vunpack.c.h.b16 %v1252
        %v1272 = vunpack.c.l.b16 %v1253
        %v1273 = vunpack.c.h.b16 %v1253
        %v1274 = vunpack.c.l.b16 %v1254
        %v1275 = vunpack.c.h.b16 %v1254
        %v1276 = vunpack.c.l.b16 %v1255
        %v1277 = vunpack.c.h.b16 %v1255
        %v1278 = vunpack.c.l.b16 %v1256
        %v1279 = vunpack.c.h.b16 %v1256
        %v1280 = vunpack.c.l.b16 %v1257
        %v1281 = vunpack.c.h.b16 %v1257
        %v1282 = vpack.c.b16 %v1266, %v1266
        %v1283 = vpack.c.b16 %v1267, %v1267
        %v1284 = vpack.c.b16 %v1268, %v1268
        %v1285 = vpack.c.b16 %v1269, %v1269
        %v1286 = vpack.c.b16 %v1270, %v1270
        %v1287 = vpack.c.b16 %v1271, %v1271
        %v1288 = vpack.c.b16 %v1272, %v1272
        %v1289 = vpack.c.b16 %v1273, %v1273
        %v1290 = vpack.c.b16 %v1274, %v1274
        %v1291 = vpack.c.b16 %v1275, %v1275
        %v1292 = vpack.c.b16 %v1276, %v1276
        %v1293 = vpack.c.b16 %v1277, %v1277
        %v1294 = vpack.c.b16 %v1278, %v1278
        %v1295 = vpack.c.b16 %v1279, %v1279
        %v1296 = vpack.c.b16 %v1280, %v1280
        %v1297 = vpack.c.b16 %v1281, %v1281
        %v1299 = vshrl.u32 %v1282, 16
        %v1301 = vrot.slane %v1299, 7
        %v1302 = vshll.u32 %v1282, 16
        %v1304 = vor.u32 %v1301, %v1302
        %v1305 = vrot.slane %v1301, 4
        %v1307 = vshrl.u32 %v1283, 16
        %v1309 = vrot.slane %v1307, 7
        %v1310 = vshll.u32 %v1283, 16
        %v1312 = vor.u32 %v1309, %v1310
        %v1313 = vsel %vm319, %v1305, %v1312
        %v1314 = vrot.slane %v1309, 4
        %v1316 = vshrl.u32 %v1284, 16
        %v1318 = vrot.slane %v1316, 7
        %v1319 = vshll.u32 %v1284, 16
        %v1321 = vor.u32 %v1318, %v1319
        %v1322 = vrot.slane %v1318, 4
        %v1324 = vshrl.u32 %v1285, 16
        %v1326 = vrot.slane %v1324, 7
        %v1327 = vshll.u32 %v1285, 16
        %v1329 = vor.u32 %v1326, %v1327
        %v1330 = vsel %vm319, %v1322, %v1329
        %v1331 = vrot.slane %v1326, 4
        %v1333 = vshrl.u32 %v1286, 16
        %v1335 = vrot.slane %v1333, 7
        %v1336 = vshll.u32 %v1286, 16
        %v1338 = vor.u32 %v1335, %v1336
        %v1339 = vrot.slane %v1335, 4
        %v1341 = vshrl.u32 %v1287, 16
        %v1343 = vrot.slane %v1341, 7
        %v1344 = vshll.u32 %v1287, 16
        %v1346 = vor.u32 %v1343, %v1344
        %v1347 = vsel %vm319, %v1339, %v1346
        %v1348 = vrot.slane %v1343, 4
        %v1350 = vshrl.u32 %v1288, 16
        %v1352 = vrot.slane %v1350, 7
        %v1353 = vshll.u32 %v1288, 16
        %v1355 = vor.u32 %v1352, %v1353
        %v1356 = vrot.slane %v1352, 4
        %v1358 = vshrl.u32 %v1289, 16
        %v1360 = vrot.slane %v1358, 7
        %v1361 = vshll.u32 %v1289, 16
        %v1363 = vor.u32 %v1360, %v1361
        %v1364 = vsel %vm319, %v1356, %v1363
        %v1365 = vrot.slane %v1360, 4
        %v1367 = vshrl.u32 %v1290, 16
        %v1369 = vrot.slane %v1367, 7
        %v1370 = vshll.u32 %v1290, 16
        %v1372 = vor.u32 %v1369, %v1370
        %v1373 = vrot.slane %v1369, 4
        %v1375 = vshrl.u32 %v1291, 16
        %v1377 = vrot.slane %v1375, 7
        %v1378 = vshll.u32 %v1291, 16
        %v1380 = vor.u32 %v1377, %v1378
        %v1381 = vsel %vm319, %v1373, %v1380
        %v1382 = vrot.slane %v1377, 4
        %v1384 = vshrl.u32 %v1292, 16
        %v1386 = vrot.slane %v1384, 7
        %v1387 = vshll.u32 %v1292, 16
        %v1389 = vor.u32 %v1386, %v1387
        %v1390 = vrot.slane %v1386, 4
        %v1392 = vshrl.u32 %v1293, 16
        %v1394 = vrot.slane %v1392, 7
        %v1395 = vshll.u32 %v1293, 16
        %v1397 = vor.u32 %v1394, %v1395
        %v1398 = vsel %vm319, %v1390, %v1397
        %v1399 = vrot.slane %v1394, 4
        %v1401 = vshrl.u32 %v1294, 16
        %v1403 = vrot.slane %v1401, 7
        %v1404 = vshll.u32 %v1294, 16
        %v1406 = vor.u32 %v1403, %v1404
        %v1407 = vrot.slane %v1403, 4
        %v1409 = vshrl.u32 %v1295, 16
        %v1411 = vrot.slane %v1409, 7
        %v1412 = vshll.u32 %v1295, 16
        %v1414 = vor.u32 %v1411, %v1412
        %v1415 = vsel %vm319, %v1407, %v1414
        %v1416 = vrot.slane %v1411, 4
        %v1418 = vshrl.u32 %v1296, 16
        %v1420 = vrot.slane %v1418, 7
        %v1421 = vshll.u32 %v1296, 16
        %v1423 = vor.u32 %v1420, %v1421
        %v1424 = vrot.slane %v1420, 4
        %v1426 = vshrl.u32 %v1297, 16
        %v1428 = vrot.slane %v1426, 7
        %v1429 = vshll.u32 %v1297, 16
        %v1431 = vor.u32 %v1428, %v1429
        %v1432 = vsel %vm319, %v1424, %v1431
        %v1433 = vrot.slane %v1428, 4
        %v1458 = vsel %vm481, %v1304, %v542
        %1459 = vst [vmem:[#allocation2] sm:$0xf] %v1458
        %1460 = vst [vmem:[#allocation2 + $0x4] sm:$0xf] %v1313
        %v1461 = vld [vmem:[#allocation2 + $0x8] sm:$0x1]
        %v1462 = vsel %vm251, %v1314, %v1461
        %1463 = vst [vmem:[#allocation2 + $0x8] sm:$0x1] %v1462
        %v1464 = vld [vmem:[#allocation2 + $0xc] sm:$0xf]
        %v1465 = vsel %vm481, %v1321, %v1464
        %1466 = vst [vmem:[#allocation2 + $0xc] sm:$0xf] %v1465
        %1467 = vst [vmem:[#allocation2 + $0x10] sm:$0xf] %v1330
        %v1468 = vld [vmem:[#allocation2 + $0x14] sm:$0x1]
        %v1469 = vsel %vm251, %v1331, %v1468
        %1470 = vst [vmem:[#allocation2 + $0x14] sm:$0x1] %v1469
        %v1471 = vld [vmem:[#allocation2 + $0x18] sm:$0xf]
        %v1472 = vsel %vm481, %v1338, %v1471
        %1473 = vst [vmem:[#allocation2 + $0x18] sm:$0xf] %v1472
        %1474 = vst [vmem:[#allocation2 + $0x1c] sm:$0xf] %v1347
        %v1475 = vld [vmem:[#allocation2 + $0x20] sm:$0x1]
        %v1476 = vsel %vm251, %v1348, %v1475
        %1477 = vst [vmem:[#allocation2 + $0x20] sm:$0x1] %v1476
        %v1478 = vld [vmem:[#allocation2 + $0x24] sm:$0xf]
        %v1479 = vsel %vm481, %v1355, %v1478
        %1480 = vst [vmem:[#allocation2 + $0x24] sm:$0xf] %v1479
        %1481 = vst [vmem:[#allocation2 + $0x28] sm:$0xf] %v1364
        %v1482 = vld [vmem:[#allocation2 + $0x2c] sm:$0x1]
        %v1483 = vsel %vm251, %v1365, %v1482
        %1484 = vst [vmem:[#allocation2 + $0x2c] sm:$0x1] %v1483
        %v1485 = vld [vmem:[#allocation2 + $0x30] sm:$0xf]
        %v1486 = vsel %vm481, %v1372, %v1485
        %1487 = vst [vmem:[#allocation2 + $0x30] sm:$0xf] %v1486
        %1488 = vst [vmem:[#allocation2 + $0x34] sm:$0xf] %v1381
        %v1489 = vld [vmem:[#allocation2 + $0x38] sm:$0x1]
        %v1490 = vsel %vm251, %v1382, %v1489
        %1491 = vst [vmem:[#allocation2 + $0x38] sm:$0x1] %v1490
        %v1492 = vld [vmem:[#allocation2 + $0x3c] sm:$0xf]
        %v1493 = vsel %vm481, %v1389, %v1492
        %1494 = vst [vmem:[#allocation2 + $0x3c] sm:$0xf] %v1493
        %1495 = vst [vmem:[#allocation2 + $0x40] sm:$0xf] %v1398
        %v1496 = vld [vmem:[#allocation2 + $0x44] sm:$0x1]
        %v1497 = vsel %vm251, %v1399, %v1496
        %1498 = vst [vmem:[#allocation2 + $0x44] sm:$0x1] %v1497
        %v1499 = vld [vmem:[#allocation2 + $0x48] sm:$0xf]
        %v1500 = vsel %vm481, %v1406, %v1499
        %1501 = vst [vmem:[#allocation2 + $0x48] sm:$0xf] %v1500
        %1502 = vst [vmem:[#allocation2 + $0x4c] sm:$0xf] %v1415
        %v1503 = vld [vmem:[#allocation2 + $0x50] sm:$0x1]
        %v1504 = vsel %vm251, %v1416, %v1503
        %1505 = vst [vmem:[#allocation2 + $0x50] sm:$0x1] %v1504
        %v1506 = vld [vmem:[#allocation2 + $0x54] sm:$0xf]
        %v1507 = vsel %vm481, %v1423, %v1506
        %1508 = vst [vmem:[#allocation2 + $0x54] sm:$0xf] %v1507
        %1509 = vst [vmem:[#allocation2 + $0x58] sm:$0xf] %v1432
        %v1510 = vld [vmem:[#allocation2 + $0x5c] sm:$0x1]
        %v1511 = vsel %vm251, %v1433, %v1510
        %1512 = vst [vmem:[#allocation2 + $0x5c] sm:$0x1] %v1511
        %v1513 = vld [vmem:[#allocation2] sm:$0xf]
        %v1514 = vld [vmem:[#allocation2 + $0x4] sm:$0xf]
        %v1515 = vld [vmem:[#allocation2 + $0xc] sm:$0xf]
        %v1516 = vld [vmem:[#allocation2 + $0x10] sm:$0xf]
        %v1517 = vld [vmem:[#allocation2 + $0x18] sm:$0xf]
        %v1518 = vld [vmem:[#allocation2 + $0x1c] sm:$0xf]
        %v1519 = vld [vmem:[#allocation2 + $0x24] sm:$0xf]
        %v1520 = vld [vmem:[#allocation2 + $0x28] sm:$0xf]
        %v1521 = vld [vmem:[#allocation2 + $0x30] sm:$0xf]
        %v1522 = vld [vmem:[#allocation2 + $0x34] sm:$0xf]
        %v1523 = vld [vmem:[#allocation2 + $0x3c] sm:$0xf]
        %v1524 = vld [vmem:[#allocation2 + $0x40] sm:$0xf]
        %v1525 = vld [vmem:[#allocation2 + $0x48] sm:$0xf]
        %v1526 = vld [vmem:[#allocation2 + $0x4c] sm:$0xf]
        %v1527 = vld [vmem:[#allocation2 + $0x54] sm:$0xf]
        %v1528 = vld [vmem:[#allocation2 + $0x58] sm:$0xf]
        %v1529 = vld [vmem:[#allocation2 + $0x8] sm:$0x1]
        %v1530 = vld [vmem:[#allocation2 + $0x14] sm:$0x1]
        %v1531 = vld [vmem:[#allocation2 + $0x20] sm:$0x1]
        %v1532 = vld [vmem:[#allocation2 + $0x2c] sm:$0x1]
        %v1533 = vld [vmem:[#allocation2 + $0x38] sm:$0x1]
        %v1534 = vld [vmem:[#allocation2 + $0x44] sm:$0x1]
        %v1535 = vld [vmem:[#allocation2 + $0x50] sm:$0x1]
        %v1536 = vld [vmem:[#allocation2 + $0x5c] sm:$0x1]
        %v1537 = vld [vmem:[#allocation2] sm:$0xe]
        %v1538 = vld [vmem:[#allocation2 + $0xc] sm:$0xe]
        %v1539 = vld [vmem:[#allocation2 + $0x18] sm:$0xe]
        %v1540 = vld [vmem:[#allocation2 + $0x24] sm:$0xe]
        %v1541 = vld [vmem:[#allocation2 + $0x30] sm:$0xe]
        %v1542 = vld [vmem:[#allocation2 + $0x3c] sm:$0xe]
        %v1543 = vld [vmem:[#allocation2 + $0x48] sm:$0xe]
        %v1544 = vld [vmem:[#allocation2 + $0x54] sm:$0xe]
        %v1561 = vunpack.c.l.b16 %v1513
        %v1562 = vunpack.c.l.b16 %v1514
        %v1563 = vunpack.c.l.b16 %v1515
        %v1564 = vunpack.c.l.b16 %v1516
        %v1565 = vunpack.c.l.b16 %v1517
        %v1566 = vunpack.c.l.b16 %v1518
        %v1567 = vunpack.c.l.b16 %v1519
        %v1568 = vunpack.c.l.b16 %v1520
        %v1569 = vunpack.c.l.b16 %v1521
        %v1570 = vunpack.c.l.b16 %v1522
        %v1571 = vunpack.c.l.b16 %v1523
        %v1572 = vunpack.c.l.b16 %v1524
        %v1573 = vunpack.c.l.b16 %v1525
        %v1574 = vunpack.c.l.b16 %v1526
        %v1575 = vunpack.c.l.b16 %v1527
        %v1576 = vunpack.c.l.b16 %v1528
        %v1577 = vpack.c.b16 %v1562, %v1561
        %v1578 = vpack.c.b16 %v1564, %v1563
        %v1579 = vpack.c.b16 %v1566, %v1565
        %v1580 = vpack.c.b16 %v1568, %v1567
        %v1581 = vpack.c.b16 %v1570, %v1569
        %v1582 = vpack.c.b16 %v1572, %v1571
        %v1583 = vpack.c.b16 %v1574, %v1573
        %v1584 = vpack.c.b16 %v1576, %v1575
        %v1601 = vunpack.c.l.b16 %v1529
        %v1602 = vunpack.c.l.b16 %v1530
        %v1603 = vunpack.c.l.b16 %v1531
        %v1604 = vunpack.c.l.b16 %v1532
        %v1605 = vunpack.c.l.b16 %v1533
        %v1606 = vunpack.c.l.b16 %v1534
        %v1607 = vunpack.c.l.b16 %v1535
        %v1608 = vunpack.c.l.b16 %v1536
        %v1609 = vpack.c.b16 %v1601, %v1601
        %v1610 = vpack.c.b16 %v1602, %v1602
        %v1611 = vpack.c.b16 %v1603, %v1603
        %v1612 = vpack.c.b16 %v1604, %v1604
        %v1613 = vpack.c.b16 %v1605, %v1605
        %v1614 = vpack.c.b16 %v1606, %v1606
        %v1615 = vpack.c.b16 %v1607, %v1607
        %v1616 = vpack.c.b16 %v1608, %v1608
        %v1618 = vshrl.u32 %v1577, 16
        %v1620 = vshll.u32 %v1577, 16
        %v1622 = vrot.slane %v1620, 1
        %v1623 = vor.u32 %v1618, %v1622
        %v1625 = vshll.u32 %v1609, 16
        %v1627 = vrot.slane %v1625, 1
        %v1628 = vsel %vm646, %v1623, %v1627
        %v1630 = vshrl.u32 %v1578, 16
        %v1632 = vshll.u32 %v1578, 16
        %v1634 = vrot.slane %v1632, 1
        %v1635 = vor.u32 %v1630, %v1634
        %v1637 = vshll.u32 %v1610, 16
        %v1639 = vrot.slane %v1637, 1
        %v1640 = vsel %vm646, %v1635, %v1639
        %v1642 = vshrl.u32 %v1579, 16
        %v1644 = vshll.u32 %v1579, 16
        %v1646 = vrot.slane %v1644, 1
        %v1647 = vor.u32 %v1642, %v1646
        %v1649 = vshll.u32 %v1611, 16
        %v1651 = vrot.slane %v1649, 1
        %v1652 = vsel %vm646, %v1647, %v1651
        %v1654 = vshrl.u32 %v1580, 16
        %v1656 = vshll.u32 %v1580, 16
        %v1658 = vrot.slane %v1656, 1
        %v1659 = vor.u32 %v1654, %v1658
        %v1661 = vshll.u32 %v1612, 16
        %v1663 = vrot.slane %v1661, 1
        %v1664 = vsel %vm646, %v1659, %v1663
        %v1666 = vshrl.u32 %v1581, 16
        %v1668 = vshll.u32 %v1581, 16
        %v1670 = vrot.slane %v1668, 1
        %v1671 = vor.u32 %v1666, %v1670
        %v1673 = vshll.u32 %v1613, 16
        %v1675 = vrot.slane %v1673, 1
        %v1676 = vsel %vm646, %v1671, %v1675
        %v1678 = vshrl.u32 %v1582, 16
        %v1680 = vshll.u32 %v1582, 16
        %v1682 = vrot.slane %v1680, 1
        %v1683 = vor.u32 %v1678, %v1682
        %v1685 = vshll.u32 %v1614, 16
        %v1687 = vrot.slane %v1685, 1
        %v1688 = vsel %vm646, %v1683, %v1687
        %v1690 = vshrl.u32 %v1583, 16
        %v1692 = vshll.u32 %v1583, 16
        %v1694 = vrot.slane %v1692, 1
        %v1695 = vor.u32 %v1690, %v1694
        %v1697 = vshll.u32 %v1615, 16
        %v1699 = vrot.slane %v1697, 1
        %v1700 = vsel %vm646, %v1695, %v1699
        %v1702 = vshrl.u32 %v1584, 16
        %v1704 = vshll.u32 %v1584, 16
        %v1706 = vrot.slane %v1704, 1
        %v1707 = vor.u32 %v1702, %v1706
        %v1709 = vshll.u32 %v1616, 16
        %v1711 = vrot.slane %v1709, 1
        %v1712 = vsel %vm646, %v1707, %v1711
        %v1729 = vunpack.c.l.b16 %v1537
        %v1730 = vunpack.c.l.b16 %v1538
        %v1731 = vunpack.c.l.b16 %v1539
        %v1732 = vunpack.c.l.b16 %v1540
        %v1733 = vunpack.c.l.b16 %v1541
        %v1734 = vunpack.c.l.b16 %v1542
        %v1735 = vunpack.c.l.b16 %v1543
        %v1736 = vunpack.c.l.b16 %v1544
        %v1737 = vpack.c.b16 %v1562, %v1729
        %v1738 = vpack.c.b16 %v1564, %v1730
        %v1739 = vpack.c.b16 %v1566, %v1731
        %v1740 = vpack.c.b16 %v1568, %v1732
        %v1741 = vpack.c.b16 %v1570, %v1733
        %v1742 = vpack.c.b16 %v1572, %v1734
        %v1743 = vpack.c.b16 %v1574, %v1735
        %v1744 = vpack.c.b16 %v1576, %v1736
        %v1745 = vrot.slane %v1737, 1
        %v1746 = vrot.slane %v1609, 1
        %v1747 = vsel %vm775, %v1745, %v1746
        %v1748 = vrot.slane %v1738, 1
        %v1749 = vrot.slane %v1610, 1
        %v1750 = vsel %vm775, %v1748, %v1749
        %v1751 = vrot.slane %v1739, 1
        %v1752 = vrot.slane %v1611, 1
        %v1753 = vsel %vm775, %v1751, %v1752
        %v1754 = vrot.slane %v1740, 1
        %v1755 = vrot.slane %v1612, 1
        %v1756 = vsel %vm775, %v1754, %v1755
        %v1757 = vrot.slane %v1741, 1
        %v1758 = vrot.slane %v1613, 1
        %v1759 = vsel %vm775, %v1757, %v1758
        %v1760 = vrot.slane %v1742, 1
        %v1761 = vrot.slane %v1614, 1
        %v1762 = vsel %vm775, %v1760, %v1761
        %v1763 = vrot.slane %v1743, 1
        %v1764 = vrot.slane %v1615, 1
        %v1765 = vsel %vm775, %v1763, %v1764
        %v1766 = vrot.slane %v1744, 1
        %v1767 = vrot.slane %v1616, 1
        %v1768 = vsel %vm775, %v1766, %v1767
        %v1777 = vld [vmem:[#allocation8] sm:$0xf]
        %v1778 = vld [vmem:[#allocation8 + $0x4] sm:$0xf]
        %v1779 = vld [vmem:[#allocation8 + $0x8] sm:$0xf]
        %v1780 = vld [vmem:[#allocation8 + $0xc] sm:$0xf]
        %v1781 = vld [vmem:[#allocation8 + $0x10] sm:$0xf]
        %v1782 = vld [vmem:[#allocation8 + $0x14] sm:$0xf]
        %v1783 = vld [vmem:[#allocation8 + $0x18] sm:$0xf]
        %v1784 = vld [vmem:[#allocation8 + $0x1c] sm:$0xf]
        %v1785 = vld [vmem:[#allocation8 + $0x20] sm:$0xf]
        %v1786 = vld [vmem:[#allocation8 + $0x24] sm:$0xf]
        %v1787 = vld [vmem:[#allocation8 + $0x28] sm:$0xf]
        %v1788 = vld [vmem:[#allocation8 + $0x2c] sm:$0xf]
        %v1789 = vld [vmem:[#allocation8 + $0x30] sm:$0xf]
        %v1790 = vld [vmem:[#allocation8 + $0x34] sm:$0xf]
        %v1791 = vld [vmem:[#allocation8 + $0x38] sm:$0xf]
        %v1792 = vld [vmem:[#allocation8 + $0x3c] sm:$0xf]
        %v1793 = vld [vmem:[#allocation8 + $0x40] sm:$0xf]
        %v1794 = vld [vmem:[#allocation8 + $0x44] sm:$0xf]
        %v1795 = vld [vmem:[#allocation8 + $0x48] sm:$0xf]
        %v1796 = vld [vmem:[#allocation8 + $0x4c] sm:$0xf]
        %v1797 = vld [vmem:[#allocation8 + $0x50] sm:$0xf]
        %v1798 = vld [vmem:[#allocation8 + $0x54] sm:$0xf]
        %v1799 = vld [vmem:[#allocation8 + $0x58] sm:$0xf]
        %v1800 = vld [vmem:[#allocation8 + $0x5c] sm:$0xf]
        %v1801 = vld [vmem:[#allocation8 + $0x60] sm:$0xf]
        %v1802 = vld [vmem:[#allocation8 + $0x64] sm:$0xf]
        %v1803 = vld [vmem:[#allocation8 + $0x68] sm:$0xf]
        %v1804 = vld [vmem:[#allocation8 + $0x6c] sm:$0xf]
        %v1805 = vld [vmem:[#allocation8 + $0x70] sm:$0xf]
        %v1806 = vld [vmem:[#allocation8 + $0x74] sm:$0xf]
        %v1807 = vld [vmem:[#allocation8 + $0x78] sm:$0xf]
        %v1808 = vld [vmem:[#allocation8 + $0x7c] sm:$0xf]
        %v1809 = vld [vmem:[#allocation8 + $0x80] sm:$0xf]
        %v1810 = vld [vmem:[#allocation8 + $0x84] sm:$0xf]
        %v1811 = vld [vmem:[#allocation8 + $0x88] sm:$0xf]
        %v1812 = vld [vmem:[#allocation8 + $0x8c] sm:$0xf]
        %v1813 = vld [vmem:[#allocation8 + $0x90] sm:$0xf]
        %v1814 = vld [vmem:[#allocation8 + $0x94] sm:$0xf]
        %v1815 = vld [vmem:[#allocation8 + $0x98] sm:$0xf]
        %v1816 = vld [vmem:[#allocation8 + $0x9c] sm:$0xf]
        %v1817 = vld [vmem:[#allocation8 + $0xa0] sm:$0xf]
        %v1818 = vld [vmem:[#allocation8 + $0xa4] sm:$0xf]
        %v1819 = vld [vmem:[#allocation8 + $0xa8] sm:$0xf]
        %v1820 = vld [vmem:[#allocation8 + $0xac] sm:$0xf]
        %v1821 = vld [vmem:[#allocation8 + $0xb0] sm:$0xf]
        %v1822 = vld [vmem:[#allocation8 + $0xb4] sm:$0xf]
        %v1823 = vld [vmem:[#allocation8 + $0xb8] sm:$0xf]
        %v1824 = vld [vmem:[#allocation8 + $0xbc] sm:$0xf]
        %v1873 = vunpack.c.l.b16 %v1777
        %v1874 = vunpack.c.l.b16 %v1778
        %v1875 = vunpack.c.l.b16 %v1779
        %v1876 = vunpack.c.l.b16 %v1780
        %v1877 = vunpack.c.l.b16 %v1781
        %v1878 = vunpack.c.l.b16 %v1782
        %v1879 = vunpack.c.l.b16 %v1783
        %v1880 = vunpack.c.l.b16 %v1784
        %v1881 = vunpack.c.l.b16 %v1785
        %v1882 = vunpack.c.l.b16 %v1786
        %v1883 = vunpack.c.l.b16 %v1787
        %v1884 = vunpack.c.l.b16 %v1788
        %v1885 = vunpack.c.l.b16 %v1789
        %v1886 = vunpack.c.l.b16 %v1790
        %v1887 = vunpack.c.l.b16 %v1791
        %v1888 = vunpack.c.l.b16 %v1792
        %v1889 = vunpack.c.l.b16 %v1793
        %v1890 = vunpack.c.l.b16 %v1794
        %v1891 = vunpack.c.l.b16 %v1795
        %v1892 = vunpack.c.l.b16 %v1796
        %v1893 = vunpack.c.l.b16 %v1797
        %v1894 = vunpack.c.l.b16 %v1798
        %v1895 = vunpack.c.l.b16 %v1799
        %v1896 = vunpack.c.l.b16 %v1800
        %v1897 = vunpack.c.l.b16 %v1801
        %v1898 = vunpack.c.l.b16 %v1802
        %v1899 = vunpack.c.l.b16 %v1803
        %v1900 = vunpack.c.l.b16 %v1804
        %v1901 = vunpack.c.l.b16 %v1805
        %v1902 = vunpack.c.l.b16 %v1806
        %v1903 = vunpack.c.l.b16 %v1807
        %v1904 = vunpack.c.l.b16 %v1808
        %v1905 = vunpack.c.l.b16 %v1809
        %v1906 = vunpack.c.l.b16 %v1810
        %v1907 = vunpack.c.l.b16 %v1811
        %v1908 = vunpack.c.l.b16 %v1812
        %v1909 = vunpack.c.l.b16 %v1813
        %v1910 = vunpack.c.l.b16 %v1814
        %v1911 = vunpack.c.l.b16 %v1815
        %v1912 = vunpack.c.l.b16 %v1816
        %v1913 = vunpack.c.l.b16 %v1817
        %v1914 = vunpack.c.l.b16 %v1818
        %v1915 = vunpack.c.l.b16 %v1819
        %v1916 = vunpack.c.l.b16 %v1820
        %v1917 = vunpack.c.l.b16 %v1821
        %v1918 = vunpack.c.l.b16 %v1822
        %v1919 = vunpack.c.l.b16 %v1823
        %v1920 = vunpack.c.l.b16 %v1824
        %v1921 = vpack.c.b16 %v1874, %v1873
        %v1922 = vpack.c.b16 %v1876, %v1875
        %v1923 = vpack.c.b16 %v1878, %v1877
        %v1924 = vpack.c.b16 %v1880, %v1879
        %v1925 = vpack.c.b16 %v1882, %v1881
        %v1926 = vpack.c.b16 %v1884, %v1883
        %v1927 = vpack.c.b16 %v1886, %v1885
        %v1928 = vpack.c.b16 %v1888, %v1887
        %v1929 = vpack.c.b16 %v1890, %v1889
        %v1930 = vpack.c.b16 %v1892, %v1891
        %v1931 = vpack.c.b16 %v1894, %v1893
        %v1932 = vpack.c.b16 %v1896, %v1895
        %v1933 = vpack.c.b16 %v1898, %v1897
        %v1934 = vpack.c.b16 %v1900, %v1899
        %v1935 = vpack.c.b16 %v1902, %v1901
        %v1936 = vpack.c.b16 %v1904, %v1903
        %v1937 = vpack.c.b16 %v1906, %v1905
        %v1938 = vpack.c.b16 %v1908, %v1907
        %v1939 = vpack.c.b16 %v1910, %v1909
        %v1940 = vpack.c.b16 %v1912, %v1911
        %v1941 = vpack.c.b16 %v1914, %v1913
        %v1942 = vpack.c.b16 %v1916, %v1915
        %v1943 = vpack.c.b16 %v1918, %v1917
        %v1944 = vpack.c.b16 %v1920, %v1919
        %1969 = vmatprep.subr.bf16.mxu0 0
        %1970 = vmatpush1.bf16.msra.mxu0 %v1928
        %1971 = vmatprep.subr.bf16.mxu0 0
        %1972 = vmatpush1.bf16.msra.mxu0 %v1927
        %1973 = vmatprep.subr.bf16.mxu0 0
        %1974 = vmatpush1.bf16.msra.mxu0 %v1926
        %1975 = vmatprep.subr.bf16.mxu0 0
        %1976 = vmatpush1.bf16.msra.mxu0 %v1925
        %1977 = vmatprep.subr.bf16.mxu0 0
        %1978 = vmatpush1.bf16.msra.mxu0 %v1924
        %1979 = vmatprep.subr.bf16.mxu0 0
        %1980 = vmatpush1.bf16.msra.mxu0 %v1923
        %1981 = vmatprep.subr.bf16.mxu0 0
        %1982 = vmatpush1.bf16.msra.mxu0 %v1922
        %1983 = vmatprep.subr.bf16.mxu0 0
        %1984 = vmatpush1.bf16.msra.mxu0 %v1921
        %1985 = vmatprep.subr.bf16.mxu0 0
        %1986 = vmatpush2.bf16.msra.mxu0 %v1936
        %1987 = vmatprep.subr.bf16.mxu0 0
        %1988 = vmatpush2.bf16.msra.mxu0 %v1935
        %1989 = vmatprep.subr.bf16.mxu0 0
        %1990 = vmatpush2.bf16.msra.mxu0 %v1934
        %1991 = vmatprep.subr.bf16.mxu0 0
        %1992 = vmatpush2.bf16.msra.mxu0 %v1933
        %1993 = vmatprep.subr.bf16.mxu0 0
        %1994 = vmatpush2.bf16.msra.mxu0 %v1932
        %1995 = vmatprep.subr.bf16.mxu0 0
        %1996 = vmatpush2.bf16.msra.mxu0 %v1931
        %1997 = vmatprep.subr.bf16.mxu0 0
        %1998 = vmatpush2.bf16.msra.mxu0 %v1930
        %1999 = vmatprep.subr.bf16.mxu0 0
        %2000 = vmatpush2.bf16.msra.mxu0 %v1929
        %2001 = vmatprep.mubr.bf16.mxu0 %v1628
        %2002 = vmatmul.mubr.bf16.gmra.mxu0 %v1577
        %v2003 = vpop.f32.mrf.mxu0
        %v2004 = vadd.f32 0.0, %v2003
        %v2005 = vpop.f32.mrf.mxu0
        %v2006 = vpop.f32.mrf.mxu0
        %v2007 = vadd.f32 0.0, %v2006
        %v2008 = vpop.f32.mrf.mxu0
        %2009 = vmatprep.mubr.bf16.mxu0 %v1640
        %2010 = vmatmul.mubr.bf16.gmra.mxu0 %v1578
        %v2011 = vpop.f32.mrf.mxu0
        %v2012 = vadd.f32 0.0, %v2011
        %v2013 = vpop.f32.mrf.mxu0
        %v2014 = vpop.f32.mrf.mxu0
        %v2015 = vadd.f32 0.0, %v2014
        %v2016 = vpop.f32.mrf.mxu0
        %2017 = vmatprep.mubr.bf16.mxu0 %v1652
        %2018 = vmatmul.mubr.bf16.gmra.mxu0 %v1579
        %v2019 = vpop.f32.mrf.mxu0
        %v2020 = vadd.f32 0.0, %v2019
        %v2021 = vpop.f32.mrf.mxu0
        %v2022 = vpop.f32.mrf.mxu0
        %v2023 = vadd.f32 0.0, %v2022
        %v2024 = vpop.f32.mrf.mxu0
        %2025 = vmatprep.mubr.bf16.mxu0 %v1664
        %2026 = vmatmul.mubr.bf16.gmra.mxu0 %v1580
        %v2027 = vpop.f32.mrf.mxu0
        %v2028 = vadd.f32 0.0, %v2027
        %v2029 = vpop.f32.mrf.mxu0
        %v2030 = vpop.f32.mrf.mxu0
        %v2031 = vadd.f32 0.0, %v2030
        %v2032 = vpop.f32.mrf.mxu0
        %2033 = vmatprep.mubr.bf16.mxu0 %v1676
        %2034 = vmatmul.mubr.bf16.gmra.mxu0 %v1581
        %v2035 = vpop.f32.mrf.mxu0
        %v2036 = vadd.f32 0.0, %v2035
        %v2037 = vpop.f32.mrf.mxu0
        %v2038 = vpop.f32.mrf.mxu0
        %v2039 = vadd.f32 0.0, %v2038
        %v2040 = vpop.f32.mrf.mxu0
        %2041 = vmatprep.mubr.bf16.mxu0 %v1688
        %2042 = vmatmul.mubr.bf16.gmra.mxu0 %v1582
        %v2043 = vpop.f32.mrf.mxu0
        %v2044 = vadd.f32 0.0, %v2043
        %v2045 = vpop.f32.mrf.mxu0
        %v2046 = vpop.f32.mrf.mxu0
        %v2047 = vadd.f32 0.0, %v2046
        %v2048 = vpop.f32.mrf.mxu0
        %2049 = vmatprep.mubr.bf16.mxu0 %v1700
        %2050 = vmatmul.mubr.bf16.gmra.mxu0 %v1583
        %v2051 = vpop.f32.mrf.mxu0
        %v2052 = vadd.f32 0.0, %v2051
        %v2053 = vpop.f32.mrf.mxu0
        %v2054 = vpop.f32.mrf.mxu0
        %v2055 = vadd.f32 0.0, %v2054
        %v2056 = vpop.f32.mrf.mxu0
        %2057 = vmatprep.mubr.bf16.mxu0 %v1712
        %2058 = vmatmul.mubr.bf16.gmra.mxu0 %v1584
        %v2059 = vpop.f32.mrf.mxu0
        %v2060 = vadd.f32 0.0, %v2059
        %v2061 = vpop.f32.mrf.mxu0
        %v2062 = vpop.f32.mrf.mxu0
        %v2063 = vadd.f32 0.0, %v2062
        %v2064 = vpop.f32.mrf.mxu0
        %2065 = vdwg.mxu0
        %2066 = vmatprep.subr.bf16.mxu0 0
        %2067 = vmatpush1.bf16.msra.mxu0 %v1944
        %2068 = vmatprep.subr.bf16.mxu0 0
        %2069 = vmatpush1.bf16.msra.mxu0 %v1943
        %2070 = vmatprep.subr.bf16.mxu0 0
        %2071 = vmatpush1.bf16.msra.mxu0 %v1942
        %2072 = vmatprep.subr.bf16.mxu0 0
        %2073 = vmatpush1.bf16.msra.mxu0 %v1941
        %2074 = vmatprep.subr.bf16.mxu0 0
        %2075 = vmatpush1.bf16.msra.mxu0 %v1940
        %2076 = vmatprep.subr.bf16.mxu0 0
        %2077 = vmatpush1.bf16.msra.mxu0 %v1939
        %2078 = vmatprep.subr.bf16.mxu0 0
        %2079 = vmatpush1.bf16.msra.mxu0 %v1938
        %2080 = vmatprep.subr.bf16.mxu0 0
        %2081 = vmatpush1.bf16.msra.mxu0 %v1937
        %2082 = vmatprep.subr.bf16.mxu0 0
        %2083 = vmatpush2.bf16.msra.mxu0 0
        %2084 = vmatprep.subr.bf16.mxu0 0
        %2085 = vmatpush2.bf16.msra.mxu0 0
        %2086 = vmatprep.subr.bf16.mxu0 0
        %2087 = vmatpush2.bf16.msra.mxu0 0
        %2088 = vmatprep.subr.bf16.mxu0 0
        %2089 = vmatpush2.bf16.msra.mxu0 0
        %2090 = vmatprep.subr.bf16.mxu0 0
        %2091 = vmatpush2.bf16.msra.mxu0 0
        %2092 = vmatprep.subr.bf16.mxu0 0
        %2093 = vmatpush2.bf16.msra.mxu0 0
        %2094 = vmatprep.subr.bf16.mxu0 0
        %2095 = vmatpush2.bf16.msra.mxu0 0
        %2096 = vmatprep.subr.bf16.mxu0 0
        %2097 = vmatpush2.bf16.msra.mxu0 0
        %2098 = vmatprep.mubr.bf16.mxu0 0
        %2099 = vmatmul.mubr.bf16.gmra.mxu0 %v1747
        %v2100 = vpop.f32.mrf.mxu0
        %v2101 = vadd.f32 %v2004, %v2100
        %v2102 = vpop.f32.mrf.mxu0
        %v2103 = vpop.f32.mrf.mxu0
        %v2104 = vadd.f32 %v2007, %v2103
        %v2105 = vpop.f32.mrf.mxu0
        %2106 = vmatprep.mubr.bf16.mxu0 0
        %2107 = vmatmul.mubr.bf16.gmra.mxu0 %v1750
        %v2108 = vpop.f32.mrf.mxu0
        %v2109 = vadd.f32 %v2012, %v2108
        %v2110 = vpop.f32.mrf.mxu0
        %v2111 = vpop.f32.mrf.mxu0
        %v2112 = vadd.f32 %v2015, %v2111
        %v2113 = vpop.f32.mrf.mxu0
        %2114 = vmatprep.mubr.bf16.mxu0 0
        %2115 = vmatmul.mubr.bf16.gmra.mxu0 %v1753
        %v2116 = vpop.f32.mrf.mxu0
        %v2117 = vadd.f32 %v2020, %v2116
        %v2118 = vpop.f32.mrf.mxu0
        %v2119 = vpop.f32.mrf.mxu0
        %v2120 = vadd.f32 %v2023, %v2119
        %v2121 = vpop.f32.mrf.mxu0
        %2122 = vmatprep.mubr.bf16.mxu0 0
        %2123 = vmatmul.mubr.bf16.gmra.mxu0 %v1756
        %v2124 = vpop.f32.mrf.mxu0
        %v2125 = vadd.f32 %v2028, %v2124
        %v2126 = vpop.f32.mrf.mxu0
        %v2127 = vpop.f32.mrf.mxu0
        %v2128 = vadd.f32 %v2031, %v2127
        %v2129 = vpop.f32.mrf.mxu0
        %2130 = vmatprep.mubr.bf16.mxu0 0
        %2131 = vmatmul.mubr.bf16.gmra.mxu0 %v1759
        %v2132 = vpop.f32.mrf.mxu0
        %v2133 = vadd.f32 %v2036, %v2132
        %v2134 = vpop.f32.mrf.mxu0
        %v2135 = vpop.f32.mrf.mxu0
        %v2136 = vadd.f32 %v2039, %v2135
        %v2137 = vpop.f32.mrf.mxu0
        %2138 = vmatprep.mubr.bf16.mxu0 0
        %2139 = vmatmul.mubr.bf16.gmra.mxu0 %v1762
        %v2140 = vpop.f32.mrf.mxu0
        %v2141 = vadd.f32 %v2044, %v2140
        %v2142 = vpop.f32.mrf.mxu0
        %v2143 = vpop.f32.mrf.mxu0
        %v2144 = vadd.f32 %v2047, %v2143
        %v2145 = vpop.f32.mrf.mxu0
        %2146 = vmatprep.mubr.bf16.mxu0 0
        %2147 = vmatmul.mubr.bf16.gmra.mxu0 %v1765
        %v2148 = vpop.f32.mrf.mxu0
        %v2149 = vadd.f32 %v2052, %v2148
        %v2150 = vpop.f32.mrf.mxu0
        %v2151 = vpop.f32.mrf.mxu0
        %v2152 = vadd.f32 %v2055, %v2151
        %v2153 = vpop.f32.mrf.mxu0
        %2154 = vmatprep.mubr.bf16.mxu0 0
        %2155 = vmatmul.mubr.bf16.gmra.mxu0 %v1768
        %v2156 = vpop.f32.mrf.mxu0
        %v2157 = vadd.f32 %v2060, %v2156
        %v2158 = vpop.f32.mrf.mxu0
        %v2159 = vpop.f32.mrf.mxu0
        %v2160 = vadd.f32 %v2063, %v2159
        %v2161 = vpop.f32.mrf.mxu0
        %2162 = vdwg.mxu0
        %v2163 = vlaneseq
        %v2164 = vshrl.u32 %v2163, 7
        %v2165 = vsub.s32 0, %v2164
        %v2166 = vrot.slane %v540, %v2165
        %v2167 = vmul.f32 %v2101, %v2166
        %v2168 = vmul.f32 %v2104, %v2166
        %v2169 = vmul.f32 %v2109, %v2166
        %v2170 = vmul.f32 %v2112, %v2166
        %v2171 = vmul.f32 %v2117, %v2166
        %v2172 = vmul.f32 %v2120, %v2166
        %v2173 = vmul.f32 %v2125, %v2166
        %v2174 = vmul.f32 %v2128, %v2166
        %v2175 = vmul.f32 %v2133, %v2166
        %v2176 = vmul.f32 %v2136, %v2166
        %v2177 = vmul.f32 %v2141, %v2166
        %v2178 = vmul.f32 %v2144, %v2166
        %v2179 = vmul.f32 %v2149, %v2166
        %v2180 = vmul.f32 %v2152, %v2166
        %v2181 = vmul.f32 %v2157, %v2166
        %v2182 = vmul.f32 %v2160, %v2166
        %v2183 = vlaneseq
        %v2184 = vshrl.u32 %v2183, 7
        %v2185 = vsub.s32 0, %v2184
        %v2186 = vrot.slane %v541, %v2185
        %v2187 = vadd.f32 %v2167, %v2186
        %v2188 = vadd.f32 %v2168, %v2186
        %v2189 = vadd.f32 %v2169, %v2186
        %v2190 = vadd.f32 %v2170, %v2186
        %v2191 = vadd.f32 %v2171, %v2186
        %v2192 = vadd.f32 %v2172, %v2186
        %v2193 = vadd.f32 %v2173, %v2186
        %v2194 = vadd.f32 %v2174, %v2186
        %v2195 = vadd.f32 %v2175, %v2186
        %v2196 = vadd.f32 %v2176, %v2186
        %v2197 = vadd.f32 %v2177, %v2186
        %v2198 = vadd.f32 %v2178, %v2186
        %v2199 = vadd.f32 %v2179, %v2186
        %v2200 = vadd.f32 %v2180, %v2186
        %v2201 = vadd.f32 %v2181, %v2186
        %v2202 = vadd.f32 %v2182, %v2186
        %v2203 = vld [vmem:[%s213] sm:$0xf]
        %v2204 = vld [vmem:[%s213 + $0x4] sm:$0xf]
        %v2205 = vld [vmem:[%s213 + $0x8] sm:$0xf]
        %v2206 = vld [vmem:[%s213 + $0xc] sm:$0xf]
        %v2207 = vld [vmem:[%s213 + $0x10] sm:$0xf]
        %v2208 = vld [vmem:[%s213 + $0x14] sm:$0xf]
        %v2209 = vld [vmem:[%s213 + $0x18] sm:$0xf]
        %v2210 = vld [vmem:[%s213 + $0x1c] sm:$0xf]
        %v2211 = vld [vmem:[%s213 + $0x20] sm:$0xf]
        %v2212 = vld [vmem:[%s213 + $0x24] sm:$0xf]
        %v2213 = vld [vmem:[%s213 + $0x28] sm:$0xf]
        %v2214 = vld [vmem:[%s213 + $0x2c] sm:$0xf]
        %v2215 = vld [vmem:[%s213 + $0x30] sm:$0xf]
        %v2216 = vld [vmem:[%s213 + $0x34] sm:$0xf]
        %v2217 = vld [vmem:[%s213 + $0x38] sm:$0xf]
        %v2218 = vld [vmem:[%s213 + $0x3c] sm:$0xf]
        %v2219 = vunpack.c.l.bf16 %v2203
        %v2220 = vunpack.c.l.bf16 %v2204
        %v2221 = vunpack.c.l.bf16 %v2205
        %v2222 = vunpack.c.l.bf16 %v2206
        %v2223 = vunpack.c.l.bf16 %v2207
        %v2224 = vunpack.c.l.bf16 %v2208
        %v2225 = vunpack.c.l.bf16 %v2209
        %v2226 = vunpack.c.l.bf16 %v2210
        %v2227 = vunpack.c.l.bf16 %v2211
        %v2228 = vunpack.c.l.bf16 %v2212
        %v2229 = vunpack.c.l.bf16 %v2213
        %v2230 = vunpack.c.l.bf16 %v2214
        %v2231 = vunpack.c.l.bf16 %v2215
        %v2232 = vunpack.c.l.bf16 %v2216
        %v2233 = vunpack.c.l.bf16 %v2217
        %v2234 = vunpack.c.l.bf16 %v2218
        %v2235 = vadd.f32 %v2187, %v2219
        %v2236 = vadd.f32 %v2188, %v2220
        %v2237 = vadd.f32 %v2189, %v2221
        %v2238 = vadd.f32 %v2190, %v2222
        %v2239 = vadd.f32 %v2191, %v2223
        %v2240 = vadd.f32 %v2192, %v2224
        %v2241 = vadd.f32 %v2193, %v2225
        %v2242 = vadd.f32 %v2194, %v2226
        %v2243 = vadd.f32 %v2195, %v2227
        %v2244 = vadd.f32 %v2196, %v2228
        %v2245 = vadd.f32 %v2197, %v2229
        %v2246 = vadd.f32 %v2198, %v2230
        %v2247 = vadd.f32 %v2199, %v2231
        %v2248 = vadd.f32 %v2200, %v2232
        %v2249 = vadd.f32 %v2201, %v2233
        %v2250 = vadd.f32 %v2202, %v2234
        %v2251 = vmax.f32 %v2235, 0.0
        %v2252 = vmax.f32 %v2236, 0.0
        %v2253 = vmax.f32 %v2237, 0.0
        %v2254 = vmax.f32 %v2238, 0.0
        %v2255 = vmax.f32 %v2239, 0.0
        %v2256 = vmax.f32 %v2240, 0.0
        %v2257 = vmax.f32 %v2241, 0.0
        %v2258 = vmax.f32 %v2242, 0.0
        %v2259 = vmax.f32 %v2243, 0.0
        %v2260 = vmax.f32 %v2244, 0.0
        %v2261 = vmax.f32 %v2245, 0.0
        %v2262 = vmax.f32 %v2246, 0.0
        %v2263 = vmax.f32 %v2247, 0.0
        %v2264 = vmax.f32 %v2248, 0.0
        %v2265 = vmax.f32 %v2249, 0.0
        %v2266 = vmax.f32 %v2250, 0.0
        %2267 = vst [vmem:[%s245] sm:$0xff] %v2251
        %2268 = vst [vmem:[%s245 + $0x8] sm:$0xff] %v2252
        %2269 = vst [vmem:[%s245 + $0x10] sm:$0xff] %v2253
        %2270 = vst [vmem:[%s245 + $0x18] sm:$0xff] %v2254
        %2271 = vst [vmem:[%s245 + $0x20] sm:$0xff] %v2255
        %2272 = vst [vmem:[%s245 + $0x28] sm:$0xff] %v2256
        %2273 = vst [vmem:[%s245 + $0x30] sm:$0xff] %v2257
        %2274 = vst [vmem:[%s245 + $0x38] sm:$0xff] %v2258
        %2275 = vst [vmem:[%s245 + $0x40] sm:$0xff] %v2259
        %2276 = vst [vmem:[%s245 + $0x48] sm:$0xff] %v2260
        %2277 = vst [vmem:[%s245 + $0x50] sm:$0xff] %v2261
        %2278 = vst [vmem:[%s245 + $0x58] sm:$0xff] %v2262
        %2279 = vst [vmem:[%s245 + $0x60] sm:$0xff] %v2263
        %2280 = vst [vmem:[%s245 + $0x68] sm:$0xff] %v2264
        %2281 = vst [vmem:[%s245 + $0x70] sm:$0xff] %v2265
        %2282 = vst [vmem:[%s245 + $0x78] sm:$0xff] %v2266
        %s2283 = sand.u32 %s119, 1
        %s2284 = scalar_lea.sflag [#allocation5], %s2283
        %s2285 = sand.u32 %s119, 1
        %s2286 = smul.addr %s2285, 128
        %s2287 = scalar_lea.vmem [#allocation9], %s2286
        // Predicated region
        $region49: #{tpu_custom_call.1} parent=35 // pred_check
          %p2288 = pneg %p129
        $region50: #{tpu_custom_call.1} parent=35 // pred_check_branch
          %2290 = sbr.rel (%p2288) target = $region52
        $region51: #{tpu_custom_call.1} parent=35 // pred_region
          %s2291 = smul.u32 8, %s22
          %s2293 = ssub.s32 2048, 2048
          %2294 = vsyncadd %s2284, %s2293
          %s2295 = smul.addr %s2291, 2
          %s2296 = smul.addr %s2295, 128
          %s2297 = scalar_lea.hbm %s4, %s2296
          %s2298 = sshll.u32 %s2287, 4
          %s2299 = int_to_ptr.vmem [resolvable:$true] %s2298
          %2304 = dma.vmem_to_hbm [thread:$0]  %s2299, 2048, %s2297, %s2284, 128, 128, 8
        $region52: #{tpu_custom_call.1} parent=35 // pred_fallthru
          _
      $region36: #{tpu_custom_call.1} parent=5 // pred_fallthru
        _
      %p2305 = scmp.le.s32.totalorder 2, %s17
      // Predicated region
      $region53: #{tpu_custom_call.1} parent=5 // pred_check
        %p2306 = pneg %p2305
      $region54: #{tpu_custom_call.1} parent=5 // pred_check_branch
        %2308 = sbr.rel (%p2306) target = $region56
      $region55: #{tpu_custom_call.1} parent=5 // pred_region
        %s2309 = ssub.s32 %s17, 2
        // Predicated region
        $region57: #{tpu_custom_call.1} parent=55 // pred_check
          %p2310 = pneg %p135
        $region58: #{tpu_custom_call.1} parent=55 // pred_check_branch
          %2312 = sbr.rel (%p2310) target = $region60
        $region59: #{tpu_custom_call.1} parent=55 // pred_region
          %s2313 = sand.u32 %s120, 1
          %s2314 = scalar_lea.sflag [#allocation5], %s2313
          %s2315 = sand.u32 %s120, 1
          %s2316 = smul.addr %s2315, 128
          %s2317 = scalar_lea.vmem [#allocation9], %s2316
          %2318 = dma.done %s2314, 2048
        $region60: #{tpu_custom_call.1} parent=55 // pred_fallthru
          _
      $region56: #{tpu_custom_call.1} parent=5 // pred_fallthru
        _
    $region6: #{tpu_custom_call.1} parent=1 // loop_footer
      %s21 = sadd.s32 1, %s17
    $region7: #{tpu_custom_call.1} parent=1 // loop_footer_branch
      %16 = sbr.rel target = $region3
    $region8: #{tpu_custom_call.1} parent=1 // loop_exit
      _
    %2319 = vsyncpa [#allocation4], 1
    %s2320 = scalar_lea.sflag [#allocation4], 1
    %2321 = vsyncpa %s2320, 1
    %2322 = vsyncpa [#allocation7], 1
    %2323 = vsyncpa [#allocation5], 1
    %s2324 = scalar_lea.sflag [#allocation5], 1
    %2325 = vsyncpa %s2324, 1

</llo_original>
